<compile_context>
chip_gen: v7x
topology: tpu7x:2x2x1
jax: 0.10.0
libtpu: 0.0.40
codegen_flags: <defaults>
</compile_context>

<pallas_src>
import math
import numpy as np
import jax
import jax.numpy as jnp
from jax.experimental import pallas as pl
from jax.experimental.pallas import tpu as pltpu


# ---------------------------------------------------------------------------
# Per-generation tuning (v5e/v6e: 128 MiB VMEM, 1 TC; v7x: 64 MiB, 2 TCs)
# ---------------------------------------------------------------------------

def _device_kind():
    try:
        return jax.devices()[0].device_kind.lower()
    except Exception:
        return ""


_KIND = _device_kind()
_BIG_VMEM = any(tag in _KIND for tag in ("v5", "v6"))     # 128 MiB physical VMEM
_VMEM_LIMIT = (64 if _BIG_VMEM else 48) * 1024 * 1024     # conservative on v7x/unknown
_TILE_BYTES = (8 if _BIG_VMEM else 3) * 1024 * 1024       # per-step working-set budget
_SPLIT_GRID = not _BIG_VMEM                               # v7x: keep >= 2 steps (2 TCs)


def _row_tile(rows, row_bytes, align=16):
    """Largest multiple-of-`align` row tile within the per-step byte budget.
    cdiv grid; ragged last block is masked by Pallas. On v7x prefer >= 2 steps
    so both TensorCores get work; on single-TC v5e/v6e fewer steps is better."""
    if rows <= align:
        return rows, 1
    budget = max(_TILE_BYTES // max(int(row_bytes), 1), align)
    cap = min(rows, budget, 8192)
    if _SPLIT_GRID and rows >= 2 * align:
        cap = min(cap, max(align, ((rows // 2) // align) * align))
    tile = max(align, (cap // align) * align)
    return tile, pl.cdiv(rows, tile)


def _cparams(n_inputs):
    return pltpu.CompilerParams(
        dimension_semantics=("parallel",),
        vmem_limit_bytes=_VMEM_LIMIT,
        allow_input_fusion=[True] * n_inputs)


def _row_spec(tr, c):
    return pl.BlockSpec((tr, c), lambda i: (i, 0))


def _full_spec(shape):
    return pl.BlockSpec(shape, lambda i: (0, 0))


# ---------------------------------------------------------------------------
# Pallas kernels (bf16 I/O, f32 compute)
# ---------------------------------------------------------------------------

def _gcn_kernel(x_ref, w_ref, b_ref, s1_ref, t1_ref, ybn_ref, down_ref, res_ref):
    # x: [shift_in-masked | raw] channels (tr, 2*Cin) bf16
    # w: block-diagonal (2*Cin, 3*Cout) bf16 -> z = [ypre | down | res]
    # Shift_gcn.bn (pre-permuted to the un-shifted frame) is fused as epilogue.
    c = ybn_ref.shape[-1]
    z = jnp.dot(x_ref[...], w_ref[...],
                preferred_element_type=jnp.float32) + b_ref[...]
    ybn_ref[...] = (z[:, :c] * s1_ref[...] + t1_ref[...]).astype(ybn_ref.dtype)
    down_ref[...] = z[:, c:2 * c].astype(down_ref.dtype)
    res_ref[...] = z[:, 2 * c:].astype(res_ref.dtype)


def _tlin_kernel(x_ref, w_ref, b_ref, o_ref):
    # Shift_tcn.temporal_linear (1x1 conv) + ReLU; bf16 in/out, f32 accum.
    h = jnp.dot(x_ref[...], w_ref[...],
                preferred_element_type=jnp.float32) + b_ref[...]
    o_ref[...] = jnp.maximum(h, 0.0).astype(o_ref.dtype)


def _final_kernel(x_ref, r_ref, s_ref, t_ref, o_ref):
    # Shift_tcn.bn2 (folded, per channel) + unit residual + final ReLU.
    # bf16 inputs promote to f32 through the f32 scale (v5e-friendly).
    o_ref[...] = jnp.maximum(x_ref[...] * s_ref[...] + t_ref[...] + r_ref[...],
                             0.0)


# ---------------------------------------------------------------------------
# pallas_call wrappers
# ---------------------------------------------------------------------------

def gcn_front(xcat, wcat, bcat, s1_vc, t1_vc):
    R, K = xcat.shape
    V, C = s1_vc.shape
    C3 = wcat.shape[1]
    align = math.lcm(16, V)                      # row tile aligned to V for bn1
    row_bytes = 2 * K * 2 + 2 * 3 * C * 2 + 2 * 2 * C * 4 + C3 * 4
    tr, steps = _row_tile(R, row_bytes, align=align)
    s1 = jnp.tile(s1_vc, (tr // V, 1))           # (tr, C): row r -> vertex r % V
    t1 = jnp.tile(t1_vc, (tr // V, 1))
    ce = pl.CostEstimate(
        flops=int(2 * R * K * C3), transcendentals=0,
        bytes_accessed=int(R * K * 2 + 3 * R * C * 2 + wcat.size * 2
                           + C3 * 4 + 2 * tr * C * 4))
    return pl.pallas_call(
        _gcn_kernel,
        out_shape=(jax.ShapeDtypeStruct((R, C), jnp.bfloat16),
                   jax.ShapeDtypeStruct((R, C), jnp.bfloat16),
                   jax.ShapeDtypeStruct((R, C), jnp.bfloat16)),
        grid_spec=pltpu.PrefetchScalarGridSpec(
            num_scalar_prefetch=0,
            grid=(steps,),
            in_specs=[_row_spec(tr, K),
                      _full_spec((K, C3)), _full_spec((1, C3)),
                      _full_spec((tr, C)), _full_spec((tr, C))],
            out_specs=[_row_spec(tr, C), _row_spec(tr, C), _row_spec(tr, C)],
        ),
        compiler_params=_cparams(5),
        cost_estimate=ce,
    )(xcat, wcat, bcat, s1, t1)


def temporal_linear(x, w, b):
    R, Cin = x.shape
    Cout = w.shape[1]
    row_bytes = 2 * Cin * 2 + 2 * Cout * 2 + Cout * 4
    tr, steps = _row_tile(R, row_bytes)
    ce = pl.CostEstimate(
        flops=int(2 * R * Cin * Cout), transcendentals=0,
        bytes_accessed=int(R * Cin * 2 + R * Cout * 2 + w.size * 2 + Cout * 4))
    return pl.pallas_call(
        _tlin_kernel,
        out_shape=jax.ShapeDtypeStruct((R, Cout), jnp.bfloat16),
        grid_spec=pltpu.PrefetchScalarGridSpec(
            num_scalar_prefetch=0,
            grid=(steps,),
            in_specs=[_row_spec(tr, Cin),
                      _full_spec((Cin, Cout)), _full_spec((1, Cout))],
            out_specs=_row_spec(tr, Cout),
        ),
        compiler_params=_cparams(3),
        cost_estimate=ce,
    )(x, w, b)


def final_combine(x, res, s, t):
    R, C = x.shape
    row_bytes = 2 * C * 2 * 2 + 2 * C * 4
    tr, steps = _row_tile(R, row_bytes)
    ce = pl.CostEstimate(
        flops=int(4 * R * C), transcendentals=0,
        bytes_accessed=int(2 * R * C * 2 + R * C * 4 + 2 * C * 4))
    return pl.pallas_call(
        _final_kernel,
        out_shape=jax.ShapeDtypeStruct((R, C), jnp.float32),
        grid_spec=pltpu.PrefetchScalarGridSpec(
            num_scalar_prefetch=0,
            grid=(steps,),
            in_specs=[_row_spec(tr, C), _row_spec(tr, C),
                      _full_spec((1, C)), _full_spec((1, C))],
            out_specs=_row_spec(tr, C),
        ),
        compiler_params=_cparams(4),
        cost_estimate=ce,
    )(x, res, s, t)


# ---------------------------------------------------------------------------
# Shift_tcn `Shift` op: per-channel bilinear shift along (t, v), zero padding.
# Separable take_along_axis interpolation, bf16 activations / f32 weights.
# ---------------------------------------------------------------------------

def bilinear_shift(x, vshift, tshift):
    N, T, V, C = x.shape
    dt = x.dtype

    def interp_along(x, pos, axis, size):
        coords = (jnp.arange(size, dtype=jnp.float32)[:, None]
                  + pos.astype(jnp.float32)[None, :])            # (size, C)
        lo = jnp.floor(coords)
        frac = coords - lo
        lo_i = lo.astype(jnp.int32)
        hi_i = lo_i + 1
        shp = [1, 1, 1, C]
        shp[axis] = size

        def piece(idx, w):
            valid = (idx >= 0) & (idx <= size - 1)
            idx_c = jnp.clip(idx, 0, size - 1)
            w = jnp.where(valid, w, 0.0)
            g = jnp.take_along_axis(x, idx_c.reshape(shp), axis=axis)
            return g.astype(jnp.float32) * w.reshape(shp)

        return (piece(lo_i, 1.0 - frac) + piece(hi_i, frac)).astype(dt)

    x = interp_along(x, tshift, axis=1, size=T)   # temporal shift
    x = interp_along(x, vshift, axis=2, size=V)   # spatial shift (~0 at init)
    return x


# ---------------------------------------------------------------------------
# Parameters (deterministic; shapes follow the module's __init__, BN folded)
# ---------------------------------------------------------------------------

def init_params(Cin, Cout, V, key):
    eps = 1e-5
    kit = iter(list(jax.random.split(key, 32)))

    def bn_fold(n):  # eval-mode BN with running mean=0, var=1
        gamma = 1.0 + 0.1 * jax.random.normal(next(kit), (n,), jnp.float32)
        beta = 0.1 * jax.random.normal(next(kit), (n,), jnp.float32)
        return gamma / jnp.sqrt(1.0 + eps), beta

    p = {}
    W = V * Cout

    # Shift_gcn spatial shift tables expressed as per-channel vertex rotations:
    #   shift_in : x[v, c] <- x[(v + c) % V, c]
    #   shift_out: y[v, c] <- y[(v - c) % V, c]
    p['vidx_in'] = jnp.asarray(
        (np.arange(V)[:, None] + np.arange(Cin)[None, :]) % V, jnp.int32)
    vout_np = (np.arange(V)[:, None] - np.arange(Cout)[None, :]) % V
    p['vidx_out'] = jnp.asarray(vout_np, jnp.int32)
    idx_out_flat = jnp.asarray(
        (vout_np * Cout + np.arange(Cout)[None, :]).reshape(-1), jnp.int32)

    # Shift_gcn Linear_weight / Feature_Mask
    w_gcn = (jax.random.normal(next(kit), (Cin, Cout), jnp.float32)
             * math.sqrt(1.0 / Cout))
    fm = 0.1 * jax.random.normal(next(kit), (V, Cin), jnp.float32)
    p['mask_mul'] = jnp.tanh(fm) + 1.0                      # (V, Cin)

    # Shift_gcn.down and TCN_GCN_unit.residual (1x1 conv + folded BN), fused
    # with the gcn linear into one block-diagonal weight -> single dot.
    wd = jax.random.normal(next(kit), (Cout, Cin), jnp.float32) * math.sqrt(2.0 / Cout)
    sd, td = bn_fold(Cout)
    w_down, b_down = wd.T * sd[None, :], td
    wr = jax.random.normal(next(kit), (Cout, Cin), jnp.float32) * math.sqrt(2.0 / Cout)
    sr, trs = bn_fold(Cout)
    w_res, b_res = wr.T * sr[None, :], trs
    wcat = jnp.zeros((2 * Cin, 3 * Cout), jnp.float32)
    wcat = wcat.at[:Cin, :Cout].set(w_gcn)
    wcat = wcat.at[Cin:, Cout:2 * Cout].set(w_down)
    wcat = wcat.at[Cin:, 2 * Cout:].set(w_res)
    p['w_cat'] = wcat.astype(jnp.bfloat16)                  # (2*Cin, 3*Cout)
    p['b_cat'] = jnp.concatenate(
        [jnp.zeros((Cout,), jnp.float32), b_down, b_res])[None, :]

    # Shift_gcn.bn = BatchNorm1d(V*Cout), folded, pre-permuted into the
    # un-shifted frame so it runs inside the matmul kernel epilogue.
    s1, t1 = bn_fold(W)
    p['bn1_scale_pre'] = (jnp.zeros((W,), jnp.float32)
                          .at[idx_out_flat].set(s1).reshape(V, Cout))
    p['bn1_shift_pre'] = (jnp.zeros((W,), jnp.float32)
                          .at[idx_out_flat].set(t1).reshape(V, Cout))

    # Shift_tcn.bn (per channel), applied in the post-gather XLA fusion
    s2, t2 = bn_fold(Cout)
    p['tcnbn_scale'] = s2
    p['tcnbn_shift'] = t2

    # Shift_tcn.shift_in / shift_out learnable positions
    p['xpos1'] = jax.random.uniform(next(kit), (Cout,), jnp.float32, -1e-8, 1e-8)
    p['ypos1'] = jax.random.uniform(next(kit), (Cout,), jnp.float32, -1.0, 1.0)
    p['xpos2'] = jax.random.uniform(next(kit), (Cout,), jnp.float32, -1e-8, 1e-8)
    p['ypos2'] = jax.random.uniform(next(kit), (Cout,), jnp.float32, -1.0, 1.0)

    # Shift_tcn.temporal_linear = Conv2d(Cout, Cout, 1) with bias
    wt = jax.random.normal(next(kit), (Cout, Cout), jnp.float32) * math.sqrt(2.0 / Cout)
    p['w_tlin'] = wt.T.astype(jnp.bfloat16)
    p['b_tlin'] = (0.05 * jax.random.normal(next(kit), (Cout,), jnp.float32))[None, :]

    # Shift_tcn.bn2 (per channel), folded
    s3, t3 = bn_fold(Cout)
    p['bn2_scale'] = s3[None, :]
    p['bn2_shift'] = t3[None, :]
    return p


# ---------------------------------------------------------------------------
# Full TCN_GCN_unit forward
# ---------------------------------------------------------------------------

def tcn_gcn_unit_forward(x0, p):
    N, Cin, T, V = x0.shape
    C = p['bn2_scale'].shape[1]
    M = N * T
    R = M * V

    # NCHW -> channel-last; shift_in (per-channel vertex rotation) + mask, then
    # concatenate the raw input for the fused down/residual matmul columns.
    # allow_input_fusion lets XLA fold this producer chain into the kernel fetch.
    x_nl = jnp.transpose(x0, (0, 2, 3, 1)).reshape(M, V, Cin)
    xs = jnp.take_along_axis(x_nl, p['vidx_in'][None], axis=1)
    xcat = jnp.concatenate([xs * p['mask_mul'][None], x_nl], axis=-1)
    xcat = xcat.reshape(R, 2 * Cin).astype(jnp.bfloat16)

    # Fused Shift_gcn linear + down + residual matmuls (bn1 applied in-kernel).
    ybn, down, res = gcn_front(xcat, p['w_cat'], p['b_cat'],
                               p['bn1_scale_pre'], p['bn1_shift_pre'])

    # shift_out (bf16 gather) -> +down -> ReLU -> Shift_tcn.bn, one XLA fusion.
    y_sh = jnp.take_along_axis(ybn.reshape(M, V, C), p['vidx_out'][None], axis=1)
    a = jnp.maximum(y_sh.astype(jnp.float32)
                    + down.reshape(M, V, C).astype(jnp.float32), 0.0)
    a = (a * p['tcnbn_scale'] + p['tcnbn_shift']).astype(jnp.bfloat16)

    # Shift_tcn: shift_in (bilinear) -> temporal_linear + ReLU -> shift_out.
    a_sh = bilinear_shift(a.reshape(N, T, V, C), p['xpos1'], p['ypos1'])
    h = temporal_linear(a_sh.reshape(R, C), p['w_tlin'], p['b_tlin'])
    h_sh = bilinear_shift(h.reshape(N, T, V, C), p['xpos2'], p['ypos2'])

    # bn2 + unit residual + final ReLU.
    out = final_combine(h_sh.reshape(R, C), res, p['bn2_scale'], p['bn2_shift'])

    # channel-last -> NCHW to preserve the module contract (stacked units would
    # be better served by staying channel-last and dropping this relayout).
    return out.reshape(N, T, V, C).transpose(0, 3, 1, 2)


# ---------------------------------------------------------------------------

if __name__ == "__main__":
    N, Cin, Cout, T, V = 2, 4, 8, 16, 16   # num_point = V, stride = 1
    key = jax.random.PRNGKey(0)
    kx, kp = jax.random.split(key)
    x0 = jax.random.normal(kx, (N, Cin, T, V), jnp.float32)
    params = init_params(Cin, Cout, V, kp)

    out = jax.jit(tcn_gcn_unit_forward)(x0, params)
    out = jax.block_until_ready(out)

    assert out.shape == (N, Cout, T, V)
    assert bool(jnp.all(jnp.isfinite(out)))
    assert bool(jnp.all(out >= 0.0))      # final ReLU
    print("KERNEL_OK")
</pallas_src>

<mosaic_0001>
module attributes {stable_mosaic.version = 11 : i64} {
  func.func @_gcn_kernel(%arg0: i32, %arg1: memref<256x8xbf16, #tpu.memory_space<vmem>>, %arg2: memref<8x24xbf16, #tpu.memory_space<vmem>>, %arg3: memref<1x24xf32, #tpu.memory_space<vmem>>, %arg4: memref<256x8xf32, #tpu.memory_space<vmem>>, %arg5: memref<256x8xf32, #tpu.memory_space<vmem>>, %arg6: memref<256x8xbf16, #tpu.memory_space<vmem>>, %arg7: memref<256x8xbf16, #tpu.memory_space<vmem>>, %arg8: memref<256x8xbf16, #tpu.memory_space<vmem>>) attributes {dimension_semantics = [#tpu.dimension_semantics<parallel>], iteration_bounds = array<i64: 2>, scalar_prefetch = 0 : i64, scratch_operands = 0 : i64, tpu.core_type = #tpu.core_type<tc>, window_params = [{transform_indices = @transform_0, window_bounds = array<i64: 256, 8>}, {pipeline_mode = #tpu.pipeline_mode<synchronous>, transform_indices = @transform_1, window_bounds = array<i64: 8, 24>}, {pipeline_mode = #tpu.pipeline_mode<synchronous>, transform_indices = @transform_2, window_bounds = array<i64: 1, 24>}, {pipeline_mode = #tpu.pipeline_mode<synchronous>, transform_indices = @transform_3, window_bounds = array<i64: 256, 8>}, {pipeline_mode = #tpu.pipeline_mode<synchronous>, transform_indices = @transform_4, window_bounds = array<i64: 256, 8>}, {transform_indices = @transform_5, window_bounds = array<i64: 256, 8>}, {transform_indices = @transform_6, window_bounds = array<i64: 256, 8>}, {transform_indices = @transform_7, window_bounds = array<i64: 256, 8>}]} {
    %c0 = arith.constant 0 : index
    %c0_0 = arith.constant 0 : index
    %0 = vector.load %arg1[%c0, %c0_0] : memref<256x8xbf16, #tpu.memory_space<vmem>>, vector<256x8xbf16>
    %c0_1 = arith.constant 0 : index
    %c0_2 = arith.constant 0 : index
    %1 = vector.load %arg2[%c0_1, %c0_2] : memref<8x24xbf16, #tpu.memory_space<vmem>>, vector<8x24xbf16>
    %cst = arith.constant dense<0.000000e+00> : vector<256x24xf32>
    %2 = tpu.matmul %0, %1, %cst {dimension_numbers = #tpu.dot_dimension_numbers<[1], [0], [0], [1], [0, 0, 1, 1], [], []>} : vector<256x8xbf16>, vector<8x24xbf16>, vector<256x24xf32> -> vector<256x24xf32>
    %c0_3 = arith.constant 0 : index
    %c0_4 = arith.constant 0 : index
    %3 = vector.load %arg3[%c0_3, %c0_4] : memref<1x24xf32, #tpu.memory_space<vmem>>, vector<1x24xf32>
    %4 = vector.broadcast %3 : vector<1x24xf32> to vector<256x24xf32>
    %5 = arith.addf %2, %4 : vector<256x24xf32>
    %6 = vector.extract_strided_slice %5 {offsets = [0, 0], sizes = [256, 8], strides = [1, 1]} : vector<256x24xf32> to vector<256x8xf32>
    %c0_5 = arith.constant 0 : index
    %c0_6 = arith.constant 0 : index
    %7 = vector.load %arg4[%c0_5, %c0_6] : memref<256x8xf32, #tpu.memory_space<vmem>>, vector<256x8xf32>
    %8 = arith.mulf %6, %7 : vector<256x8xf32>
    %c0_7 = arith.constant 0 : index
    %c0_8 = arith.constant 0 : index
    %9 = vector.load %arg5[%c0_7, %c0_8] : memref<256x8xf32, #tpu.memory_space<vmem>>, vector<256x8xf32>
    %10 = arith.addf %8, %9 : vector<256x8xf32>
    %11 = arith.truncf %10 : vector<256x8xf32> to vector<256x8xbf16>
    %c0_9 = arith.constant 0 : index
    %c0_10 = arith.constant 0 : index
    %12 = vector.load %arg6[%c0_9, %c0_10] : memref<256x8xbf16, #tpu.memory_space<vmem>>, vector<256x8xbf16>
    tpu.vector_store %arg6[%c0_9, %c0_10], %11 {strides = array<i32>} : memref<256x8xbf16, #tpu.memory_space<vmem>>, vector<256x8xbf16>,
    %13 = vector.extract_strided_slice %5 {offsets = [0, 8], sizes = [256, 8], strides = [1, 1]} : vector<256x24xf32> to vector<256x8xf32>
    %14 = arith.truncf %13 : vector<256x8xf32> to vector<256x8xbf16>
    %c0_11 = arith.constant 0 : index
    %c0_12 = arith.constant 0 : index
    %15 = vector.load %arg7[%c0_11, %c0_12] : memref<256x8xbf16, #tpu.memory_space<vmem>>, vector<256x8xbf16>
    tpu.vector_store %arg7[%c0_11, %c0_12], %14 {strides = array<i32>} : memref<256x8xbf16, #tpu.memory_space<vmem>>, vector<256x8xbf16>,
    %16 = vector.extract_strided_slice %5 {offsets = [0, 16], sizes = [256, 8], strides = [1, 1]} : vector<256x24xf32> to vector<256x8xf32>
    %17 = arith.truncf %16 : vector<256x8xf32> to vector<256x8xbf16>
    %c0_13 = arith.constant 0 : index
    %c0_14 = arith.constant 0 : index
    %18 = vector.load %arg8[%c0_13, %c0_14] : memref<256x8xbf16, #tpu.memory_space<vmem>>, vector<256x8xbf16>
    tpu.vector_store %arg8[%c0_13, %c0_14], %17 {strides = array<i32>} : memref<256x8xbf16, #tpu.memory_space<vmem>>, vector<256x8xbf16>,
    return
  }
  func.func @transform_0(%arg0: i32) -> (i32, i32) {
    %c0_i32 = arith.constant 0 : i32
    %c0_i32_0 = arith.constant 0 : i32
    return %arg0, %c0_i32 : i32, i32
  }
  func.func @transform_1(%arg0: i32) -> (i32, i32) {
    %c0_i32 = arith.constant 0 : i32
    %c0_i32_0 = arith.constant 0 : i32
    %c0_i32_1 = arith.constant 0 : i32
    return %c0_i32, %c0_i32_0 : i32, i32
  }
  func.func @transform_2(%arg0: i32) -> (i32, i32) {
    %c0_i32 = arith.constant 0 : i32
    %c0_i32_0 = arith.constant 0 : i32
    %c0_i32_1 = arith.constant 0 : i32
    return %c0_i32, %c0_i32_0 : i32, i32
  }
  func.func @transform_3(%arg0: i32) -> (i32, i32) {
    %c0_i32 = arith.constant 0 : i32
    %c0_i32_0 = arith.constant 0 : i32
    %c0_i32_1 = arith.constant 0 : i32
    return %c0_i32, %c0_i32_0 : i32, i32
  }
  func.func @transform_4(%arg0: i32) -> (i32, i32) {
    %c0_i32 = arith.constant 0 : i32
    %c0_i32_0 = arith.constant 0 : i32
    %c0_i32_1 = arith.constant 0 : i32
    return %c0_i32, %c0_i32_0 : i32, i32
  }
  func.func @transform_5(%arg0: i32) -> (i32, i32) {
    %c0_i32 = arith.constant 0 : i32
    %c0_i32_0 = arith.constant 0 : i32
    return %arg0, %c0_i32 : i32, i32
  }
  func.func @transform_6(%arg0: i32) -> (i32, i32) {
    %c0_i32 = arith.constant 0 : i32
    %c0_i32_0 = arith.constant 0 : i32
    return %arg0, %c0_i32 : i32, i32
  }
  func.func @transform_7(%arg0: i32) -> (i32, i32) {
    %c0_i32 = arith.constant 0 : i32
    %c0_i32_0 = arith.constant 0 : i32
    return %arg0, %c0_i32 : i32, i32
  }
}

module attributes {stable_mosaic.version = 11 : i64} {
  func.func @_tlin_kernel(%arg0: i32, %arg1: memref<256x8xbf16, #tpu.memory_space<vmem>>, %arg2: memref<8x8xbf16, #tpu.memory_space<vmem>>, %arg3: memref<1x8xf32, #tpu.memory_space<vmem>>, %arg4: memref<256x8xbf16, #tpu.memory_space<vmem>>) attributes {dimension_semantics = [#tpu.dimension_semantics<parallel>], iteration_bounds = array<i64: 2>, scalar_prefetch = 0 : i64, scratch_operands = 0 : i64, tpu.core_type = #tpu.core_type<tc>, window_params = [{transform_indices = @transform_0, window_bounds = array<i64: 256, 8>}, {pipeline_mode = #tpu.pipeline_mode<synchronous>, transform_indices = @transform_1, window_bounds = array<i64: 8, 8>}, {pipeline_mode = #tpu.pipeline_mode<synchronous>, transform_indices = @transform_2, window_bounds = array<i64: 1, 8>}, {transform_indices = @transform_3, window_bounds = array<i64: 256, 8>}]} {
    %c0 = arith.constant 0 : index
    %c0_0 = arith.constant 0 : index
    %0 = vector.load %arg1[%c0, %c0_0] : memref<256x8xbf16, #tpu.memory_space<vmem>>, vector<256x8xbf16>
    %c0_1 = arith.constant 0 : index
    %c0_2 = arith.constant 0 : index
    %1 = vector.load %arg2[%c0_1, %c0_2] : memref<8x8xbf16, #tpu.memory_space<vmem>>, vector<8x8xbf16>
    %cst = arith.constant dense<0.000000e+00> : vector<256x8xf32>
    %2 = tpu.matmul %0, %1, %cst {dimension_numbers = #tpu.dot_dimension_numbers<[1], [0], [0], [1], [0, 0, 1, 1], [], []>} : vector<256x8xbf16>, vector<8x8xbf16>, vector<256x8xf32> -> vector<256x8xf32>
    %c0_3 = arith.constant 0 : index
    %c0_4 = arith.constant 0 : index
    %3 = vector.load %arg3[%c0_3, %c0_4] : memref<1x8xf32, #tpu.memory_space<vmem>>, vector<1x8xf32>
    %4 = vector.broadcast %3 : vector<1x8xf32> to vector<256x8xf32>
    %5 = arith.addf %2, %4 : vector<256x8xf32>
    %cst_5 = arith.constant 0.000000e+00 : f32
    %6 = vector.broadcast %cst_5 : f32 to vector<256x8xf32>
    %7 = arith.maximumf %5, %6 : vector<256x8xf32>
    %8 = arith.truncf %7 : vector<256x8xf32> to vector<256x8xbf16>
    %c0_6 = arith.constant 0 : index
    %c0_7 = arith.constant 0 : index
    %9 = vector.load %arg4[%c0_6, %c0_7] : memref<256x8xbf16, #tpu.memory_space<vmem>>, vector<256x8xbf16>
    tpu.vector_store %arg4[%c0_6, %c0_7], %8 {strides = array<i32>} : memref<256x8xbf16, #tpu.memory_space<vmem>>, vector<256x8xbf16>,
    return
  }
  func.func @transform_0(%arg0: i32) -> (i32, i32) {
    %c0_i32 = arith.constant 0 : i32
    %c0_i32_0 = arith.constant 0 : i32
    return %arg0, %c0_i32 : i32, i32
  }
  func.func @transform_1(%arg0: i32) -> (i32, i32) {
    %c0_i32 = arith.constant 0 : i32
    %c0_i32_0 = arith.constant 0 : i32
    %c0_i32_1 = arith.constant 0 : i32
    return %c0_i32, %c0_i32_0 : i32, i32
  }
  func.func @transform_2(%arg0: i32) -> (i32, i32) {
    %c0_i32 = arith.constant 0 : i32
    %c0_i32_0 = arith.constant 0 : i32
    %c0_i32_1 = arith.constant 0 : i32
    return %c0_i32, %c0_i32_0 : i32, i32
  }
  func.func @transform_3(%arg0: i32) -> (i32, i32) {
    %c0_i32 = arith.constant 0 : i32
    %c0_i32_0 = arith.constant 0 : i32
    return %arg0, %c0_i32 : i32, i32
  }
}

module attributes {stable_mosaic.version = 11 : i64} {
  func.func @_final_kernel(%arg0: i32, %arg1: memref<256x8xbf16, #tpu.memory_space<vmem>>, %arg2: memref<256x8xbf16, #tpu.memory_space<vmem>>, %arg3: memref<1x8xf32, #tpu.memory_space<vmem>>, %arg4: memref<1x8xf32, #tpu.memory_space<vmem>>, %arg5: memref<256x8xf32, #tpu.memory_space<vmem>>) attributes {dimension_semantics = [#tpu.dimension_semantics<parallel>], iteration_bounds = array<i64: 2>, scalar_prefetch = 0 : i64, scratch_operands = 0 : i64, tpu.core_type = #tpu.core_type<tc>, window_params = [{transform_indices = @transform_0, window_bounds = array<i64: 256, 8>}, {transform_indices = @transform_1, window_bounds = array<i64: 256, 8>}, {pipeline_mode = #tpu.pipeline_mode<synchronous>, transform_indices = @transform_2, window_bounds = array<i64: 1, 8>}, {pipeline_mode = #tpu.pipeline_mode<synchronous>, transform_indices = @transform_3, window_bounds = array<i64: 1, 8>}, {transform_indices = @transform_4, window_bounds = array<i64: 256, 8>}]} {
    %c0 = arith.constant 0 : index
    %c0_0 = arith.constant 0 : index
    %0 = vector.load %arg1[%c0, %c0_0] : memref<256x8xbf16, #tpu.memory_space<vmem>>, vector<256x8xbf16>
    %c0_1 = arith.constant 0 : index
    %c0_2 = arith.constant 0 : index
    %1 = vector.load %arg3[%c0_1, %c0_2] : memref<1x8xf32, #tpu.memory_space<vmem>>, vector<1x8xf32>
    %2 = arith.extf %0 : vector<256x8xbf16> to vector<256x8xf32>
    %3 = vector.broadcast %1 : vector<1x8xf32> to vector<256x8xf32>
    %4 = arith.mulf %2, %3 : vector<256x8xf32>
    %c0_3 = arith.constant 0 : index
    %c0_4 = arith.constant 0 : index
    %5 = vector.load %arg4[%c0_3, %c0_4] : memref<1x8xf32, #tpu.memory_space<vmem>>, vector<1x8xf32>
    %6 = vector.broadcast %5 : vector<1x8xf32> to vector<256x8xf32>
    %7 = arith.addf %4, %6 : vector<256x8xf32>
    %c0_5 = arith.constant 0 : index
    %c0_6 = arith.constant 0 : index
    %8 = vector.load %arg2[%c0_5, %c0_6] : memref<256x8xbf16, #tpu.memory_space<vmem>>, vector<256x8xbf16>
    %9 = arith.extf %8 : vector<256x8xbf16> to vector<256x8xf32>
    %10 = arith.addf %7, %9 : vector<256x8xf32>
    %cst = arith.constant 0.000000e+00 : f32
    %11 = vector.broadcast %cst : f32 to vector<256x8xf32>
    %12 = arith.maximumf %10, %11 : vector<256x8xf32>
    %c0_7 = arith.constant 0 : index
    %c0_8 = arith.constant 0 : index
    %13 = vector.load %arg5[%c0_7, %c0_8] : memref<256x8xf32, #tpu.memory_space<vmem>>, vector<256x8xf32>
    tpu.vector_store %arg5[%c0_7, %c0_8], %12 {strides = array<i32>} : memref<256x8xf32, #tpu.memory_space<vmem>>, vector<256x8xf32>,
    return
  }
  func.func @transform_0(%arg0: i32) -> (i32, i32) {
    %c0_i32 = arith.constant 0 : i32
    %c0_i32_0 = arith.constant 0 : i32
    return %arg0, %c0_i32 : i32, i32
  }
  func.func @transform_1(%arg0: i32) -> (i32, i32) {
    %c0_i32 = arith.constant 0 : i32
    %c0_i32_0 = arith.constant 0 : i32
    return %arg0, %c0_i32 : i32, i32
  }
  func.func @transform_2(%arg0: i32) -> (i32, i32) {
    %c0_i32 = arith.constant 0 : i32
    %c0_i32_0 = arith.constant 0 : i32
    %c0_i32_1 = arith.constant 0 : i32
    return %c0_i32, %c0_i32_0 : i32, i32
  }
  func.func @transform_3(%arg0: i32) -> (i32, i32) {
    %c0_i32 = arith.constant 0 : i32
    %c0_i32_0 = arith.constant 0 : i32
    %c0_i32_1 = arith.constant 0 : i32
    return %c0_i32, %c0_i32_0 : i32, i32
  }
  func.func @transform_4(%arg0: i32) -> (i32, i32) {
    %c0_i32 = arith.constant 0 : i32
    %c0_i32_0 = arith.constant 0 : i32
    return %arg0, %c0_i32 : i32, i32
  }
}

</mosaic_0001>

<llo_original>
// kernel: tcn_gcn_unit_forward.3
$region0: #{tcn_gcn_unit_forward.3}
  #allocation0 [shape = 'u32[]', space=smem, size = 0x4, offset = 0x4, fixed_abs, tag = 'smem constant byte address 0x4 - core index']
  #allocation1 [shape = 'u32[144,128]{1,0:T(1,128)}', space=vmem, size = 0x12000, scoped, tag = 'internal scratch']
  %s0 = inlined_call_operand.vmem [shape: bf16[512,8], index: 0, kind: input, shape index: {}]
  %s1 = inlined_call_operand.vmem [shape: bf16[8,24], index: 1, kind: input, shape index: {}]
  %s2 = inlined_call_operand.vmem [shape: f32[1,24], index: 2, kind: input, shape index: {}]
  %s3 = inlined_call_operand.vmem [shape: f32[256,8], index: 3, kind: input, shape index: {}]
  %s4 = inlined_call_operand.vmem [shape: f32[256,8], index: 4, kind: input, shape index: {}]
  %s5 = inlined_call_operand.vmem [shape: bf16[512,8], index: 5, kind: output, shape index: {0}]
  %s6 = inlined_call_operand.vmem [shape: bf16[512,8], index: 6, kind: output, shape index: {1}]
  %s7 = inlined_call_operand.vmem [shape: bf16[512,8], index: 7, kind: output, shape index: {2}]
  %8 = xla_tuple %s5, %s6, %s7
  %s9 = sld [smem:[#allocation0]]
  $region69: #{tcn_gcn_unit_forward.3} parent=0
    _
  %s11 = ssub.s32 1, %s9
  %s12 = scalar_select 0, %s11, %s9
  loop: start=0, step=1, limit=4
  $region2: #{tcn_gcn_unit_forward.3} parent=0 // loop_pre_header
    _
  $region3: #{tcn_gcn_unit_forward.3} parent=0 // loop_header
    %s14 = sphi 0, %s18
    %p15 = scmp.ge.s32.totalorder %s14, 4
    %s24 = sphi 0, %s26
    %s27 = sphi 0, %s24
    %s28 = sphi 0, %s27
    %s44 = sphi 0, %s28
    %s48 = sphi 0, %s48
    %s50 = sphi 0, %s48
    %s51 = sphi 0, %s50
    %s65 = sphi 0, %s51
    %s69 = sphi 0, %s69
    %s71 = sphi 0, %s69
    %s72 = sphi 0, %s71
    %s86 = sphi 0, %s72
    %s90 = sphi 0, %s90
    %s92 = sphi 0, %s90
    %s93 = sphi 0, %s92
    %s107 = sphi 0, %s93
    %s111 = sphi 0, %s111
    %s113 = sphi 0, %s111
    %s114 = sphi 0, %s113
    %s128 = sphi 0, %s114
    %s134 = sphi 0, %s136
    %s137 = sphi 0, %s134
    %s138 = sphi 0, %s137
    %s154 = sphi 0, %s138
    %s160 = sphi 0, %s162
    %s163 = sphi 0, %s160
    %s164 = sphi 0, %s163
    %s180 = sphi 0, %s164
    %s186 = sphi 0, %s188
    %s189 = sphi 0, %s186
    %s190 = sphi 0, %s189
    %s206 = sphi 0, %s190
  $region4: #{tcn_gcn_unit_forward.3} parent=0 // loop_header_branch
    %17 = sbr.rel (%p15) target = $region8
  $region5: #{tcn_gcn_unit_forward.3} parent=0 // loop_body
    %s19 = ssub.s32 %s14, 1
    %s20 = ssub.s32 %s14, 2
    %s21 = sadd.s32 %s14, 1
    %s22 = ssub.s32 %s14, %s21
    %p23 = scmp.eq.s32.totalorder %s22, 0
    %s25 = sadd.s32 %s24, 1
    %s26 = scalar_select %p23, %s24, %s25
    %p29 = pneg %p23
    %p30 = scmp.eq.s32.totalorder %s14, 1
    %p31 = por %p29, %p30
    %p32 = scmp.ne.s32.totalorder %s24, %s27
    %p33 = scmp.eq.s32.totalorder %s14, 0
    %p34 = por %p32, %p33
    %p35 = scmp.ne.s32.totalorder %s24, %s27
    %p36 = scmp.eq.s32.totalorder %s19, 1
    %p37 = por %p35, %p36
    %p38 = scmp.ne.s32.totalorder %s27, %s28
    %p39 = scmp.eq.s32.totalorder %s19, 0
    %p40 = por %p38, %p39
    %p41 = scmp.ne.s32.totalorder %s27, %s28
    %p42 = scmp.eq.s32.totalorder %s20, 1
    %p43 = por %p41, %p42
    %p45 = scmp.ne.s32.totalorder %s28, %s44
    %p46 = scmp.eq.s32.totalorder %s20, 0
    %p47 = por %p45, %p46
    %s49 = sadd.s32 %s48, 1
    %p52 = scmp.eq.s32.totalorder %s14, 1
    %p53 = scmp.ne.s32.totalorder %s48, %s50
    %p54 = scmp.eq.s32.totalorder %s14, 0
    %p55 = por %p53, %p54
    %p56 = scmp.ne.s32.totalorder %s48, %s50
    %p57 = scmp.eq.s32.totalorder %s19, 1
    %p58 = por %p56, %p57
    %p59 = scmp.ne.s32.totalorder %s50, %s51
    %p60 = scmp.eq.s32.totalorder %s19, 0
    %p61 = por %p59, %p60
    %p62 = scmp.ne.s32.totalorder %s50, %s51
    %p63 = scmp.eq.s32.totalorder %s20, 1
    %p64 = por %p62, %p63
    %p66 = scmp.ne.s32.totalorder %s51, %s65
    %p67 = scmp.eq.s32.totalorder %s20, 0
    %p68 = por %p66, %p67
    %s70 = sadd.s32 %s69, 1
    %p73 = scmp.eq.s32.totalorder %s14, 1
    %p74 = scmp.ne.s32.totalorder %s69, %s71
    %p75 = scmp.eq.s32.totalorder %s14, 0
    %p76 = por %p74, %p75
    %p77 = scmp.ne.s32.totalorder %s69, %s71
    %p78 = scmp.eq.s32.totalorder %s19, 1
    %p79 = por %p77, %p78
    %p80 = scmp.ne.s32.totalorder %s71, %s72
    %p81 = scmp.eq.s32.totalorder %s19, 0
    %p82 = por %p80, %p81
    %p83 = scmp.ne.s32.totalorder %s71, %s72
    %p84 = scmp.eq.s32.totalorder %s20, 1
    %p85 = por %p83, %p84
    %p87 = scmp.ne.s32.totalorder %s72, %s86
    %p88 = scmp.eq.s32.totalorder %s20, 0
    %p89 = por %p87, %p88
    %s91 = sadd.s32 %s90, 1
    %p94 = scmp.eq.s32.totalorder %s14, 1
    %p95 = scmp.ne.s32.totalorder %s90, %s92
    %p96 = scmp.eq.s32.totalorder %s14, 0
    %p97 = por %p95, %p96
    %p98 = scmp.ne.s32.totalorder %s90, %s92
    %p99 = scmp.eq.s32.totalorder %s19, 1
    %p100 = por %p98, %p99
    %p101 = scmp.ne.s32.totalorder %s92, %s93
    %p102 = scmp.eq.s32.totalorder %s19, 0
    %p103 = por %p101, %p102
    %p104 = scmp.ne.s32.totalorder %s92, %s93
    %p105 = scmp.eq.s32.totalorder %s20, 1
    %p106 = por %p104, %p105
    %p108 = scmp.ne.s32.totalorder %s93, %s107
    %p109 = scmp.eq.s32.totalorder %s20, 0
    %p110 = por %p108, %p109
    %s112 = sadd.s32 %s111, 1
    %p115 = scmp.eq.s32.totalorder %s14, 1
    %p116 = scmp.ne.s32.totalorder %s111, %s113
    %p117 = scmp.eq.s32.totalorder %s14, 0
    %p118 = por %p116, %p117
    %p119 = scmp.ne.s32.totalorder %s111, %s113
    %p120 = scmp.eq.s32.totalorder %s19, 1
    %p121 = por %p119, %p120
    %p122 = scmp.ne.s32.totalorder %s113, %s114
    %p123 = scmp.eq.s32.totalorder %s19, 0
    %p124 = por %p122, %p123
    %p125 = scmp.ne.s32.totalorder %s113, %s114
    %p126 = scmp.eq.s32.totalorder %s20, 1
    %p127 = por %p125, %p126
    %p129 = scmp.ne.s32.totalorder %s114, %s128
    %p130 = scmp.eq.s32.totalorder %s20, 0
    %p131 = por %p129, %p130
    %s132 = ssub.s32 %s14, %s21
    %p133 = scmp.eq.s32.totalorder %s132, 0
    %s135 = sadd.s32 %s134, 1
    %s136 = scalar_select %p133, %s134, %s135
    %p139 = pneg %p133
    %p140 = scmp.eq.s32.totalorder %s14, 1
    %p141 = por %p139, %p140
    %p142 = scmp.ne.s32.totalorder %s134, %s137
    %p143 = scmp.eq.s32.totalorder %s14, 0
    %p144 = por %p142, %p143
    %p145 = scmp.ne.s32.totalorder %s134, %s137
    %p146 = scmp.eq.s32.totalorder %s19, 1
    %p147 = por %p145, %p146
    %p148 = scmp.ne.s32.totalorder %s137, %s138
    %p149 = scmp.eq.s32.totalorder %s19, 0
    %p150 = por %p148, %p149
    %p151 = scmp.ne.s32.totalorder %s137, %s138
    %p152 = scmp.eq.s32.totalorder %s20, 1
    %p153 = por %p151, %p152
    %p155 = scmp.ne.s32.totalorder %s138, %s154
    %p156 = scmp.eq.s32.totalorder %s20, 0
    %p157 = por %p155, %p156
    %s158 = ssub.s32 %s14, %s21
    %p159 = scmp.eq.s32.totalorder %s158, 0
    %s161 = sadd.s32 %s160, 1
    %s162 = scalar_select %p159, %s160, %s161
    %p165 = pneg %p159
    %p166 = scmp.eq.s32.totalorder %s14, 1
    %p167 = por %p165, %p166
    %p168 = scmp.ne.s32.totalorder %s160, %s163
    %p169 = scmp.eq.s32.totalorder %s14, 0
    %p170 = por %p168, %p169
    %p171 = scmp.ne.s32.totalorder %s160, %s163
    %p172 = scmp.eq.s32.totalorder %s19, 1
    %p173 = por %p171, %p172
    %p174 = scmp.ne.s32.totalorder %s163, %s164
    %p175 = scmp.eq.s32.totalorder %s19, 0
    %p176 = por %p174, %p175
    %p177 = scmp.ne.s32.totalorder %s163, %s164
    %p178 = scmp.eq.s32.totalorder %s20, 1
    %p179 = por %p177, %p178
    %p181 = scmp.ne.s32.totalorder %s164, %s180
    %p182 = scmp.eq.s32.totalorder %s20, 0
    %p183 = por %p181, %p182
    %s184 = ssub.s32 %s14, %s21
    %p185 = scmp.eq.s32.totalorder %s184, 0
    %s187 = sadd.s32 %s186, 1
    %s188 = scalar_select %p185, %s186, %s187
    %p191 = pneg %p185
    %p192 = scmp.eq.s32.totalorder %s14, 1
    %p193 = por %p191, %p192
    %p194 = scmp.ne.s32.totalorder %s186, %s189
    %p195 = scmp.eq.s32.totalorder %s14, 0
    %p196 = por %p194, %p195
    %p197 = scmp.ne.s32.totalorder %s186, %s189
    %p198 = scmp.eq.s32.totalorder %s19, 1
    %p199 = por %p197, %p198
    %p200 = scmp.ne.s32.totalorder %s189, %s190
    %p201 = scmp.eq.s32.totalorder %s19, 0
    %p202 = por %p200, %p201
    %p203 = scmp.ne.s32.totalorder %s189, %s190
    %p204 = scmp.eq.s32.totalorder %s20, 1
    %p205 = por %p203, %p204
    %p207 = scmp.ne.s32.totalorder %s190, %s206
    %p208 = scmp.eq.s32.totalorder %s20, 0
    %p209 = por %p207, %p208
    %p210 = scmp.le.s32.totalorder 1, %s14
    %p211 = scmp.lt.s32.totalorder %s14, 3
    %p212 = pnand %p210, %p211
    %p213 = pneg %p212
    // Predicated region
    $region9: #{tcn_gcn_unit_forward.3} parent=5 // pred_check
      _
    $region10: #{tcn_gcn_unit_forward.3} parent=5 // pred_check_branch
      %215 = sbr.rel (%p212) target = $region12
    $region11: #{tcn_gcn_unit_forward.3} parent=5 // pred_region
      %s216 = ssub.s32 %s14, 1
      // Predicated region
      $region13: #{tcn_gcn_unit_forward.3} parent=11 // pred_check
        %p217 = pneg %p61
      $region14: #{tcn_gcn_unit_forward.3} parent=11 // pred_check_branch
        %219 = sbr.rel (%p217) target = $region16
      $region15: #{tcn_gcn_unit_forward.3} parent=11 // pred_region
        _
      $region16: #{tcn_gcn_unit_forward.3} parent=11 // pred_fallthru
        _
      // Predicated region
      $region17: #{tcn_gcn_unit_forward.3} parent=11 // pred_check
        %p220 = pneg %p82
      $region18: #{tcn_gcn_unit_forward.3} parent=11 // pred_check_branch
        %222 = sbr.rel (%p220) target = $region20
      $region19: #{tcn_gcn_unit_forward.3} parent=11 // pred_region
        _
      $region20: #{tcn_gcn_unit_forward.3} parent=11 // pred_fallthru
        _
      // Predicated region
      $region21: #{tcn_gcn_unit_forward.3} parent=11 // pred_check
        %p223 = pneg %p103
      $region22: #{tcn_gcn_unit_forward.3} parent=11 // pred_check_branch
        %225 = sbr.rel (%p223) target = $region24
      $region23: #{tcn_gcn_unit_forward.3} parent=11 // pred_region
        _
      $region24: #{tcn_gcn_unit_forward.3} parent=11 // pred_fallthru
        _
      // Predicated region
      $region25: #{tcn_gcn_unit_forward.3} parent=11 // pred_check
        %p226 = pneg %p124
      $region26: #{tcn_gcn_unit_forward.3} parent=11 // pred_check_branch
        %228 = sbr.rel (%p226) target = $region28
      $region27: #{tcn_gcn_unit_forward.3} parent=11 // pred_region
        _
      $region28: #{tcn_gcn_unit_forward.3} parent=11 // pred_fallthru
        _
    $region12: #{tcn_gcn_unit_forward.3} parent=5 // pred_fallthru
      _
    %p229 = scmp.lt.s32.totalorder %s14, 2
    // Predicated region
    $region29: #{tcn_gcn_unit_forward.3} parent=5 // pred_check
      %p230 = pneg %p229
    $region30: #{tcn_gcn_unit_forward.3} parent=5 // pred_check_branch
      %232 = sbr.rel (%p230) target = $region32
    $region31: #{tcn_gcn_unit_forward.3} parent=5 // pred_region
      // Predicated region
      $region33: #{tcn_gcn_unit_forward.3} parent=31 // pred_check
        %p233 = pneg %p34
      $region34: #{tcn_gcn_unit_forward.3} parent=31 // pred_check_branch
        %235 = sbr.rel (%p233) target = $region36
      $region35: #{tcn_gcn_unit_forward.3} parent=31 // pred_region
        %s236 = smul.u32 32, %s14
        %p237 = scmp.lt.s32.totalorder %s236, 63
        %s238 = scalar_select %p237, %s236, 63
        %s239 = smul.addr %s238, 4
        %s240 = scalar_lea.vmem %s0, %s239
        %s241 = smul.u32 32, %s14
      $region36: #{tcn_gcn_unit_forward.3} parent=31 // pred_fallthru
        _
    $region32: #{tcn_gcn_unit_forward.3} parent=5 // pred_fallthru
      _
    %p242 = scmp.le.s32.totalorder 1, %s14
    %p243 = scmp.lt.s32.totalorder %s14, 3
    %p244 = pnand %p242, %p243
    %p245 = pneg %p244
    // Predicated region
    $region37: #{tcn_gcn_unit_forward.3} parent=5 // pred_check
      _
    $region38: #{tcn_gcn_unit_forward.3} parent=5 // pred_check_branch
      %247 = sbr.rel (%p244) target = $region40
    $region39: #{tcn_gcn_unit_forward.3} parent=5 // pred_region
      %s248 = ssub.s32 %s14, 1
      %s249 = smul.u32 32, %s19
      %p250 = scmp.lt.s32.totalorder %s249, 63
      %s251 = scalar_select %p250, %s249, 63
      %s252 = smul.addr %s251, 4
      %s253 = scalar_lea.vmem %s0, %s252
      %p254 = pneg %p40
      %p255 = pneg %p37
      %p256 = pneg %p61
      %p257 = pneg %p58
      %p258 = pneg %p82
      %p259 = pneg %p79
      %p260 = pneg %p103
      %p261 = pneg %p100
      %p262 = pneg %p124
      %p263 = pneg %p121
      %p264 = pneg %p150
      %p265 = pneg %p147
      %s266 = smul.u32 32, %s19
      %p267 = scmp.lt.s32.totalorder %s266, 63
      %s268 = scalar_select %p267, %s266, 63
      %s269 = smul.addr %s268, 4
      %s270 = scalar_lea.vmem %s5, %s269
      %p271 = pneg %p176
      %p272 = pneg %p173
      %s273 = smul.u32 32, %s19
      %p274 = scmp.lt.s32.totalorder %s273, 63
      %s275 = scalar_select %p274, %s273, 63
      %s276 = smul.addr %s275, 4
      %s277 = scalar_lea.vmem %s6, %s276
      %p278 = pneg %p202
      %p279 = pneg %p199
      %s280 = smul.u32 32, %s19
      %p281 = scmp.lt.s32.totalorder %s280, 63
      %s282 = scalar_select %p281, %s280, 63
      %s283 = smul.addr %s282, 4
      %s284 = scalar_lea.vmem %s7, %s283
      %s285 = smul.u32 32, %s19
      %p286 = scmp.lt.s32.totalorder %s285, 63
      %s287 = scalar_select %p286, %s285, 63
      %s288 = smul.addr %s287, 4
      %s289 = scalar_lea.vmem %s0, %s288
      %s290 = smul.u32 32, %s19
      %s291 = smul.u32 32, %s19
      %p292 = scmp.lt.s32.totalorder %s291, 63
      %s293 = scalar_select %p292, %s291, 63
      %s294 = smul.addr %s293, 4
      %s295 = scalar_lea.vmem %s5, %s294
      %s296 = smul.u32 32, %s19
      %s297 = smul.u32 32, %s19
      %p298 = scmp.lt.s32.totalorder %s297, 63
      %s299 = scalar_select %p298, %s297, 63
      %s300 = smul.addr %s299, 4
      %s301 = scalar_lea.vmem %s6, %s300
      %s302 = smul.u32 32, %s19
      %s303 = smul.u32 32, %s19
      %p304 = scmp.lt.s32.totalorder %s303, 63
      %s305 = scalar_select %p304, %s303, 63
      %s306 = smul.addr %s305, 4
      %s307 = scalar_lea.vmem %s7, %s306
      %s308 = smul.u32 32, %s19
      %v310 = vld [vmem:[%s289] sm:$0xf]
      %v311 = vld [vmem:[%s289 + $0x4] sm:$0xf]
      %v312 = vld [vmem:[%s289 + $0x8] sm:$0xf]
      %v313 = vld [vmem:[%s289 + $0xc] sm:$0xf]
      %v314 = vld [vmem:[%s289 + $0x10] sm:$0xf]
      %v315 = vld [vmem:[%s289 + $0x14] sm:$0xf]
      %v316 = vld [vmem:[%s289 + $0x18] sm:$0xf]
      %v317 = vld [vmem:[%s289 + $0x1c] sm:$0xf]
      %v318 = vld [vmem:[%s289 + $0x20] sm:$0xf]
      %v319 = vld [vmem:[%s289 + $0x24] sm:$0xf]
      %v320 = vld [vmem:[%s289 + $0x28] sm:$0xf]
      %v321 = vld [vmem:[%s289 + $0x2c] sm:$0xf]
      %v322 = vld [vmem:[%s289 + $0x30] sm:$0xf]
      %v323 = vld [vmem:[%s289 + $0x34] sm:$0xf]
      %v324 = vld [vmem:[%s289 + $0x38] sm:$0xf]
      %v325 = vld [vmem:[%s289 + $0x3c] sm:$0xf]
      %v326 = vld [vmem:[%s289 + $0x40] sm:$0xf]
      %v327 = vld [vmem:[%s289 + $0x44] sm:$0xf]
      %v328 = vld [vmem:[%s289 + $0x48] sm:$0xf]
      %v329 = vld [vmem:[%s289 + $0x4c] sm:$0xf]
      %v330 = vld [vmem:[%s289 + $0x50] sm:$0xf]
      %v331 = vld [vmem:[%s289 + $0x54] sm:$0xf]
      %v332 = vld [vmem:[%s289 + $0x58] sm:$0xf]
      %v333 = vld [vmem:[%s289 + $0x5c] sm:$0xf]
      %v334 = vld [vmem:[%s289 + $0x60] sm:$0xf]
      %v335 = vld [vmem:[%s289 + $0x64] sm:$0xf]
      %v336 = vld [vmem:[%s289 + $0x68] sm:$0xf]
      %v337 = vld [vmem:[%s289 + $0x6c] sm:$0xf]
      %v338 = vld [vmem:[%s289 + $0x70] sm:$0xf]
      %v339 = vld [vmem:[%s289 + $0x74] sm:$0xf]
      %v340 = vld [vmem:[%s289 + $0x78] sm:$0xf]
      %v341 = vld [vmem:[%s289 + $0x7c] sm:$0xf]
      %v342 = vld [vmem:[%s1] sm:$0xf]
      %v343 = vld [vmem:[%s2] sm:$0x1]
      %v345 = vlaneseq
      %v346 = vshrl.u32 %v345, 7
      %v347 = vsub.s32 0, %v346
      %v348 = vrot.slane %v343, %v347
      %v382 = vunpack.c.l.b16 %v310
      %v383 = vunpack.c.l.b16 %v311
      %v384 = vunpack.c.l.b16 %v312
      %v385 = vunpack.c.l.b16 %v313
      %v386 = vunpack.c.l.b16 %v314
      %v387 = vunpack.c.l.b16 %v315
      %v388 = vunpack.c.l.b16 %v316
      %v389 = vunpack.c.l.b16 %v317
      %v390 = vunpack.c.l.b16 %v318
      %v391 = vunpack.c.l.b16 %v319
      %v392 = vunpack.c.l.b16 %v320
      %v393 = vunpack.c.l.b16 %v321
      %v394 = vunpack.c.l.b16 %v322
      %v395 = vunpack.c.l.b16 %v323
      %v396 = vunpack.c.l.b16 %v324
      %v397 = vunpack.c.l.b16 %v325
      %v398 = vunpack.c.l.b16 %v326
      %v399 = vunpack.c.l.b16 %v327
      %v400 = vunpack.c.l.b16 %v328
      %v401 = vunpack.c.l.b16 %v329
      %v402 = vunpack.c.l.b16 %v330
      %v403 = vunpack.c.l.b16 %v331
      %v404 = vunpack.c.l.b16 %v332
      %v405 = vunpack.c.l.b16 %v333
      %v406 = vunpack.c.l.b16 %v334
      %v407 = vunpack.c.l.b16 %v335
      %v408 = vunpack.c.l.b16 %v336
      %v409 = vunpack.c.l.b16 %v337
      %v410 = vunpack.c.l.b16 %v338
      %v411 = vunpack.c.l.b16 %v339
      %v412 = vunpack.c.l.b16 %v340
      %v413 = vunpack.c.l.b16 %v341
      %v414 = vpack.c.b16 %v383, %v382
      %v415 = vpack.c.b16 %v385, %v384
      %v416 = vpack.c.b16 %v387, %v386
      %v417 = vpack.c.b16 %v389, %v388
      %v418 = vpack.c.b16 %v391, %v390
      %v419 = vpack.c.b16 %v393, %v392
      %v420 = vpack.c.b16 %v395, %v394
      %v421 = vpack.c.b16 %v397, %v396
      %v422 = vpack.c.b16 %v399, %v398
      %v423 = vpack.c.b16 %v401, %v400
      %v424 = vpack.c.b16 %v403, %v402
      %v425 = vpack.c.b16 %v405, %v404
      %v426 = vpack.c.b16 %v407, %v406
      %v427 = vpack.c.b16 %v409, %v408
      %v428 = vpack.c.b16 %v411, %v410
      %v429 = vpack.c.b16 %v413, %v412
      %vm430 = vcmask 64512
      %v432 = vsel %vm430, %v414, 0
      %v435 = vsel %vm430, %v415, 0
      %v438 = vsel %vm430, %v416, 0
      %v441 = vsel %vm430, %v417, 0
      %v444 = vsel %vm430, %v418, 0
      %v447 = vsel %vm430, %v419, 0
      %v450 = vsel %vm430, %v420, 0
      %v453 = vsel %vm430, %v421, 0
      %v456 = vsel %vm430, %v422, 0
      %v459 = vsel %vm430, %v423, 0
      %v462 = vsel %vm430, %v424, 0
      %v465 = vsel %vm430, %v425, 0
      %v468 = vsel %vm430, %v426, 0
      %v471 = vsel %vm430, %v427, 0
      %v474 = vsel %vm430, %v428, 0
      %v477 = vsel %vm430, %v429, 0
      %vm479 = vcmask 1043456
      %v481 = vsel %vm479, %v342, 0
      %483 = vmatprep.subr.bf16.mxu0 0
      %484 = vmatpush1.bf16.msra.mxu0 %v481
      %485 = vmatprep.subr.bf16.mxu0 0
      %486 = vmatpush1.bf16.msra.mxu0 0
      %487 = vmatprep.subr.bf16.mxu0 0
      %488 = vmatpush1.bf16.msra.mxu0 0
      %489 = vmatprep.subr.bf16.mxu0 0
      %490 = vmatpush1.bf16.msra.mxu0 0
      %491 = vmatprep.subr.bf16.mxu0 0
      %492 = vmatpush1.bf16.msra.mxu0 0
      %493 = vmatprep.subr.bf16.mxu0 0
      %494 = vmatpush1.bf16.msra.mxu0 0
      %495 = vmatprep.subr.bf16.mxu0 0
      %496 = vmatpush1.bf16.msra.mxu0 0
      %497 = vmatprep.subr.bf16.mxu0 0
      %498 = vmatpush1.bf16.msra.mxu0 0
      %499 = vmatprep.subr.bf16.mxu0 0
      %500 = vmatpush1.bf16.msra.mxu0 0
      %501 = vmatprep.subr.bf16.mxu0 0
      %502 = vmatpush1.bf16.msra.mxu0 0
      %503 = vmatprep.subr.bf16.mxu0 0
      %504 = vmatpush1.bf16.msra.mxu0 0
      %505 = vmatprep.subr.bf16.mxu0 0
      %506 = vmatpush1.bf16.msra.mxu0 0
      %507 = vmatprep.subr.bf16.mxu0 0
      %508 = vmatpush1.bf16.msra.mxu0 0
      %509 = vmatprep.subr.bf16.mxu0 0
      %510 = vmatpush1.bf16.msra.mxu0 0
      %511 = vmatprep.subr.bf16.mxu0 0
      %512 = vmatpush1.bf16.msra.mxu0 0
      %513 = vmatprep.subr.bf16.mxu0 0
      %514 = vmatpush1.bf16.msra.mxu0 0
      %515 = vmatprep.mubr.bf16.mxu0 0
      %516 = vmatmul.mubr.bf16.gmra.mrb[0].mxu0 %v432
      %v517 = vpop.f32.mrb[0].mxu0
      %v518 = vadd.f32 %v348, %v517
      %v519 = vpop.f32.mrb[0].mxu0
      %v520 = vpop.f32.mrb[0].mxu0
      %v521 = vadd.f32 %v348, %v520
      %v522 = vpop.f32.mrb[0].mxu0
      %523 = vmatprep.mubr.bf16.mxu0 0
      %524 = vmatmul.mubr.bf16.gmra.mrb[0].mxu0 %v435
      %v525 = vpop.f32.mrb[0].mxu0
      %v526 = vadd.f32 %v348, %v525
      %v527 = vpop.f32.mrb[0].mxu0
      %v528 = vpop.f32.mrb[0].mxu0
      %v529 = vadd.f32 %v348, %v528
      %v530 = vpop.f32.mrb[0].mxu0
      %531 = vmatprep.mubr.bf16.mxu0 0
      %532 = vmatmul.mubr.bf16.gmra.mrb[0].mxu0 %v438
      %v533 = vpop.f32.mrb[0].mxu0
      %v534 = vadd.f32 %v348, %v533
      %v535 = vpop.f32.mrb[0].mxu0
      %v536 = vpop.f32.mrb[0].mxu0
      %v537 = vadd.f32 %v348, %v536
      %v538 = vpop.f32.mrb[0].mxu0
      %539 = vmatprep.mubr.bf16.mxu0 0
      %540 = vmatmul.mubr.bf16.gmra.mrb[0].mxu0 %v441
      %v541 = vpop.f32.mrb[0].mxu0
      %v542 = vadd.f32 %v348, %v541
      %v543 = vpop.f32.mrb[0].mxu0
      %v544 = vpop.f32.mrb[0].mxu0
      %v545 = vadd.f32 %v348, %v544
      %v546 = vpop.f32.mrb[0].mxu0
      %547 = vmatprep.mubr.bf16.mxu0 0
      %548 = vmatmul.mubr.bf16.gmra.mrb[0].mxu0 %v444
      %v549 = vpop.f32.mrb[0].mxu0
      %v550 = vadd.f32 %v348, %v549
      %v551 = vpop.f32.mrb[0].mxu0
      %v552 = vpop.f32.mrb[0].mxu0
      %v553 = vadd.f32 %v348, %v552
      %v554 = vpop.f32.mrb[0].mxu0
      %555 = vmatprep.mubr.bf16.mxu0 0
      %556 = vmatmul.mubr.bf16.gmra.mrb[0].mxu0 %v447
      %v557 = vpop.f32.mrb[0].mxu0
      %v558 = vadd.f32 %v348, %v557
      %v559 = vpop.f32.mrb[0].mxu0
      %v560 = vpop.f32.mrb[0].mxu0
      %v561 = vadd.f32 %v348, %v560
      %v562 = vpop.f32.mrb[0].mxu0
      %563 = vmatprep.mubr.bf16.mxu0 0
      %564 = vmatmul.mubr.bf16.gmra.mrb[0].mxu0 %v450
      %v565 = vpop.f32.mrb[0].mxu0
      %v566 = vadd.f32 %v348, %v565
      %v567 = vpop.f32.mrb[0].mxu0
      %v568 = vpop.f32.mrb[0].mxu0
      %v569 = vadd.f32 %v348, %v568
      %v570 = vpop.f32.mrb[0].mxu0
      %571 = vmatprep.mubr.bf16.mxu0 0
      %572 = vmatmul.mubr.bf16.gmra.mrb[0].mxu0 %v453
      %v573 = vpop.f32.mrb[0].mxu0
      %v574 = vadd.f32 %v348, %v573
      %v575 = vpop.f32.mrb[0].mxu0
      %v576 = vpop.f32.mrb[0].mxu0
      %v577 = vadd.f32 %v348, %v576
      %v578 = vpop.f32.mrb[0].mxu0
      %579 = vmatprep.mubr.bf16.mxu0 0
      %580 = vmatmul.mubr.bf16.gmra.mrb[0].mxu0 %v456
      %v581 = vpop.f32.mrb[0].mxu0
      %v582 = vadd.f32 %v348, %v581
      %v583 = vpop.f32.mrb[0].mxu0
      %v584 = vpop.f32.mrb[0].mxu0
      %v585 = vadd.f32 %v348, %v584
      %v586 = vpop.f32.mrb[0].mxu0
      %587 = vmatprep.mubr.bf16.mxu0 0
      %588 = vmatmul.mubr.bf16.gmra.mrb[0].mxu0 %v459
      %v589 = vpop.f32.mrb[0].mxu0
      %v590 = vadd.f32 %v348, %v589
      %v591 = vpop.f32.mrb[0].mxu0
      %v592 = vpop.f32.mrb[0].mxu0
      %v593 = vadd.f32 %v348, %v592
      %v594 = vpop.f32.mrb[0].mxu0
      %595 = vmatprep.mubr.bf16.mxu0 0
      %596 = vmatmul.mubr.bf16.gmra.mrb[0].mxu0 %v462
      %v597 = vpop.f32.mrb[0].mxu0
      %v598 = vadd.f32 %v348, %v597
      %v599 = vpop.f32.mrb[0].mxu0
      %v600 = vpop.f32.mrb[0].mxu0
      %v601 = vadd.f32 %v348, %v600
      %v602 = vpop.f32.mrb[0].mxu0
      %603 = vmatprep.mubr.bf16.mxu0 0
      %604 = vmatmul.mubr.bf16.gmra.mrb[0].mxu0 %v465
      %v605 = vpop.f32.mrb[0].mxu0
      %v606 = vadd.f32 %v348, %v605
      %v607 = vpop.f32.mrb[0].mxu0
      %v608 = vpop.f32.mrb[0].mxu0
      %v609 = vadd.f32 %v348, %v608
      %v610 = vpop.f32.mrb[0].mxu0
      %611 = vmatprep.mubr.bf16.mxu0 0
      %612 = vmatmul.mubr.bf16.gmra.mrb[0].mxu0 %v468
      %v613 = vpop.f32.mrb[0].mxu0
      %v614 = vadd.f32 %v348, %v613
      %v615 = vpop.f32.mrb[0].mxu0
      %v616 = vpop.f32.mrb[0].mxu0
      %v617 = vadd.f32 %v348, %v616
      %v618 = vpop.f32.mrb[0].mxu0
      %619 = vmatprep.mubr.bf16.mxu0 0
      %620 = vmatmul.mubr.bf16.gmra.mrb[0].mxu0 %v471
      %v621 = vpop.f32.mrb[0].mxu0
      %v622 = vadd.f32 %v348, %v621
      %v623 = vpop.f32.mrb[0].mxu0
      %v624 = vpop.f32.mrb[0].mxu0
      %v625 = vadd.f32 %v348, %v624
      %v626 = vpop.f32.mrb[0].mxu0
      %627 = vmatprep.mubr.bf16.mxu0 0
      %628 = vmatmul.mubr.bf16.gmra.mrb[0].mxu0 %v474
      %v629 = vpop.f32.mrb[0].mxu0
      %v630 = vadd.f32 %v348, %v629
      %v631 = vpop.f32.mrb[0].mxu0
      %v632 = vpop.f32.mrb[0].mxu0
      %v633 = vadd.f32 %v348, %v632
      %v634 = vpop.f32.mrb[0].mxu0
      %635 = vmatprep.mubr.bf16.mxu0 0
      %636 = vmatmul.mubr.bf16.gmra.mrb[0].mxu0 %v477
      %v637 = vpop.f32.mrb[0].mxu0
      %v638 = vadd.f32 %v348, %v637
      %v639 = vpop.f32.mrb[0].mxu0
      %v640 = vpop.f32.mrb[0].mxu0
      %v641 = vadd.f32 %v348, %v640
      %v642 = vpop.f32.mrb[0].mxu0
      %643 = vdwg.mxu0
      %v644 = vld [vmem:[%s3] sm:$0xff]
      %v645 = vld [vmem:[%s3 + $0x8] sm:$0xff]
      %v646 = vld [vmem:[%s3 + $0x10] sm:$0xff]
      %v647 = vld [vmem:[%s3 + $0x18] sm:$0xff]
      %v648 = vld [vmem:[%s3 + $0x20] sm:$0xff]
      %v649 = vld [vmem:[%s3 + $0x28] sm:$0xff]
      %v650 = vld [vmem:[%s3 + $0x30] sm:$0xff]
      %v651 = vld [vmem:[%s3 + $0x38] sm:$0xff]
      %v652 = vld [vmem:[%s3 + $0x40] sm:$0xff]
      %v653 = vld [vmem:[%s3 + $0x48] sm:$0xff]
      %v654 = vld [vmem:[%s3 + $0x50] sm:$0xff]
      %v655 = vld [vmem:[%s3 + $0x58] sm:$0xff]
      %v656 = vld [vmem:[%s3 + $0x60] sm:$0xff]
      %v657 = vld [vmem:[%s3 + $0x68] sm:$0xff]
      %v658 = vld [vmem:[%s3 + $0x70] sm:$0xff]
      %v659 = vld [vmem:[%s3 + $0x78] sm:$0xff]
      %v660 = vld [vmem:[%s3 + $0x80] sm:$0xff]
      %v661 = vld [vmem:[%s3 + $0x88] sm:$0xff]
      %v662 = vld [vmem:[%s3 + $0x90] sm:$0xff]
      %v663 = vld [vmem:[%s3 + $0x98] sm:$0xff]
      %v664 = vld [vmem:[%s3 + $0xa0] sm:$0xff]
      %v665 = vld [vmem:[%s3 + $0xa8] sm:$0xff]
      %v666 = vld [vmem:[%s3 + $0xb0] sm:$0xff]
      %v667 = vld [vmem:[%s3 + $0xb8] sm:$0xff]
      %v668 = vld [vmem:[%s3 + $0xc0] sm:$0xff]
      %v669 = vld [vmem:[%s3 + $0xc8] sm:$0xff]
      %v670 = vld [vmem:[%s3 + $0xd0] sm:$0xff]
      %v671 = vld [vmem:[%s3 + $0xd8] sm:$0xff]
      %v672 = vld [vmem:[%s3 + $0xe0] sm:$0xff]
      %v673 = vld [vmem:[%s3 + $0xe8] sm:$0xff]
      %v674 = vld [vmem:[%s3 + $0xf0] sm:$0xff]
      %v675 = vld [vmem:[%s3 + $0xf8] sm:$0xff]
      %v676 = vmul.f32 %v518, %v644
      %v677 = vmul.f32 %v521, %v645
      %v678 = vmul.f32 %v526, %v646
      %v679 = vmul.f32 %v529, %v647
      %v680 = vmul.f32 %v534, %v648
      %v681 = vmul.f32 %v537, %v649
      %v682 = vmul.f32 %v542, %v650
      %v683 = vmul.f32 %v545, %v651
      %v684 = vmul.f32 %v550, %v652
      %v685 = vmul.f32 %v553, %v653
      %v686 = vmul.f32 %v558, %v654
      %v687 = vmul.f32 %v561, %v655
      %v688 = vmul.f32 %v566, %v656
      %v689 = vmul.f32 %v569, %v657
      %v690 = vmul.f32 %v574, %v658
      %v691 = vmul.f32 %v577, %v659
      %v692 = vmul.f32 %v582, %v660
      %v693 = vmul.f32 %v585, %v661
      %v694 = vmul.f32 %v590, %v662
      %v695 = vmul.f32 %v593, %v663
      %v696 = vmul.f32 %v598, %v664
      %v697 = vmul.f32 %v601, %v665
      %v698 = vmul.f32 %v606, %v666
      %v699 = vmul.f32 %v609, %v667
      %v700 = vmul.f32 %v614, %v668
      %v701 = vmul.f32 %v617, %v669
      %v702 = vmul.f32 %v622, %v670
      %v703 = vmul.f32 %v625, %v671
      %v704 = vmul.f32 %v630, %v672
      %v705 = vmul.f32 %v633, %v673
      %v706 = vmul.f32 %v638, %v674
      %v707 = vmul.f32 %v641, %v675
      %v708 = vld [vmem:[%s4] sm:$0xff]
      %v709 = vld [vmem:[%s4 + $0x8] sm:$0xff]
      %v710 = vld [vmem:[%s4 + $0x10] sm:$0xff]
      %v711 = vld [vmem:[%s4 + $0x18] sm:$0xff]
      %v712 = vld [vmem:[%s4 + $0x20] sm:$0xff]
      %v713 = vld [vmem:[%s4 + $0x28] sm:$0xff]
      %v714 = vld [vmem:[%s4 + $0x30] sm:$0xff]
      %v715 = vld [vmem:[%s4 + $0x38] sm:$0xff]
      %v716 = vld [vmem:[%s4 + $0x40] sm:$0xff]
      %v717 = vld [vmem:[%s4 + $0x48] sm:$0xff]
      %v718 = vld [vmem:[%s4 + $0x50] sm:$0xff]
      %v719 = vld [vmem:[%s4 + $0x58] sm:$0xff]
      %v720 = vld [vmem:[%s4 + $0x60] sm:$0xff]
      %v721 = vld [vmem:[%s4 + $0x68] sm:$0xff]
      %v722 = vld [vmem:[%s4 + $0x70] sm:$0xff]
      %v723 = vld [vmem:[%s4 + $0x78] sm:$0xff]
      %v724 = vld [vmem:[%s4 + $0x80] sm:$0xff]
      %v725 = vld [vmem:[%s4 + $0x88] sm:$0xff]
      %v726 = vld [vmem:[%s4 + $0x90] sm:$0xff]
      %v727 = vld [vmem:[%s4 + $0x98] sm:$0xff]
      %v728 = vld [vmem:[%s4 + $0xa0] sm:$0xff]
      %v729 = vld [vmem:[%s4 + $0xa8] sm:$0xff]
      %v730 = vld [vmem:[%s4 + $0xb0] sm:$0xff]
      %v731 = vld [vmem:[%s4 + $0xb8] sm:$0xff]
      %v732 = vld [vmem:[%s4 + $0xc0] sm:$0xff]
      %v733 = vld [vmem:[%s4 + $0xc8] sm:$0xff]
      %v734 = vld [vmem:[%s4 + $0xd0] sm:$0xff]
      %v735 = vld [vmem:[%s4 + $0xd8] sm:$0xff]
      %v736 = vld [vmem:[%s4 + $0xe0] sm:$0xff]
      %v737 = vld [vmem:[%s4 + $0xe8] sm:$0xff]
      %v738 = vld [vmem:[%s4 + $0xf0] sm:$0xff]
      %v739 = vld [vmem:[%s4 + $0xf8] sm:$0xff]
      %v740 = vadd.f32 %v676, %v708
      %v741 = vadd.f32 %v677, %v709
      %v742 = vadd.f32 %v678, %v710
      %v743 = vadd.f32 %v679, %v711
      %v744 = vadd.f32 %v680, %v712
      %v745 = vadd.f32 %v681, %v713
      %v746 = vadd.f32 %v682, %v714
      %v747 = vadd.f32 %v683, %v715
      %v748 = vadd.f32 %v684, %v716
      %v749 = vadd.f32 %v685, %v717
      %v750 = vadd.f32 %v686, %v718
      %v751 = vadd.f32 %v687, %v719
      %v752 = vadd.f32 %v688, %v720
      %v753 = vadd.f32 %v689, %v721
      %v754 = vadd.f32 %v690, %v722
      %v755 = vadd.f32 %v691, %v723
      %v756 = vadd.f32 %v692, %v724
      %v757 = vadd.f32 %v693, %v725
      %v758 = vadd.f32 %v694, %v726
      %v759 = vadd.f32 %v695, %v727
      %v760 = vadd.f32 %v696, %v728
      %v761 = vadd.f32 %v697, %v729
      %v762 = vadd.f32 %v698, %v730
      %v763 = vadd.f32 %v699, %v731
      %v764 = vadd.f32 %v700, %v732
      %v765 = vadd.f32 %v701, %v733
      %v766 = vadd.f32 %v702, %v734
      %v767 = vadd.f32 %v703, %v735
      %v768 = vadd.f32 %v704, %v736
      %v769 = vadd.f32 %v705, %v737
      %v770 = vadd.f32 %v706, %v738
      %v771 = vadd.f32 %v707, %v739
      %v772 = vpack.c.bf16 %v741, %v740
      %v773 = vpack.c.bf16 %v743, %v742
      %v774 = vpack.c.bf16 %v745, %v744
      %v775 = vpack.c.bf16 %v747, %v746
      %v776 = vpack.c.bf16 %v749, %v748
      %v777 = vpack.c.bf16 %v751, %v750
      %v778 = vpack.c.bf16 %v753, %v752
      %v779 = vpack.c.bf16 %v755, %v754
      %v780 = vpack.c.bf16 %v757, %v756
      %v781 = vpack.c.bf16 %v759, %v758
      %v782 = vpack.c.bf16 %v761, %v760
      %v783 = vpack.c.bf16 %v763, %v762
      %v784 = vpack.c.bf16 %v765, %v764
      %v785 = vpack.c.bf16 %v767, %v766
      %v786 = vpack.c.bf16 %v769, %v768
      %v787 = vpack.c.bf16 %v771, %v770
      %v804 = vunpack.c.l.b16 %v772
      %v805 = vunpack.c.h.b16 %v772
      %v806 = vunpack.c.l.b16 %v773
      %v807 = vunpack.c.h.b16 %v773
      %v808 = vunpack.c.l.b16 %v774
      %v809 = vunpack.c.h.b16 %v774
      %v810 = vunpack.c.l.b16 %v775
      %v811 = vunpack.c.h.b16 %v775
      %v812 = vunpack.c.l.b16 %v776
      %v813 = vunpack.c.h.b16 %v776
      %v814 = vunpack.c.l.b16 %v777
      %v815 = vunpack.c.h.b16 %v777
      %v816 = vunpack.c.l.b16 %v778
      %v817 = vunpack.c.h.b16 %v778
      %v818 = vunpack.c.l.b16 %v779
      %v819 = vunpack.c.h.b16 %v779
      %v820 = vunpack.c.l.b16 %v780
      %v821 = vunpack.c.h.b16 %v780
      %v822 = vunpack.c.l.b16 %v781
      %v823 = vunpack.c.h.b16 %v781
      %v824 = vunpack.c.l.b16 %v782
      %v825 = vunpack.c.h.b16 %v782
      %v826 = vunpack.c.l.b16 %v783
      %v827 = vunpack.c.h.b16 %v783
      %v828 = vunpack.c.l.b16 %v784
      %v829 = vunpack.c.h.b16 %v784
      %v830 = vunpack.c.l.b16 %v785
      %v831 = vunpack.c.h.b16 %v785
      %v832 = vunpack.c.l.b16 %v786
      %v833 = vunpack.c.h.b16 %v786
      %v834 = vunpack.c.l.b16 %v787
      %v835 = vunpack.c.h.b16 %v787
      %v836 = vpack.c.b16 %v804, %v804
      %v837 = vpack.c.b16 %v805, %v805
      %v838 = vpack.c.b16 %v806, %v806
      %v839 = vpack.c.b16 %v807, %v807
      %v840 = vpack.c.b16 %v808, %v808
      %v841 = vpack.c.b16 %v809, %v809
      %v842 = vpack.c.b16 %v810, %v810
      %v843 = vpack.c.b16 %v811, %v811
      %v844 = vpack.c.b16 %v812, %v812
      %v845 = vpack.c.b16 %v813, %v813
      %v846 = vpack.c.b16 %v814, %v814
      %v847 = vpack.c.b16 %v815, %v815
      %v848 = vpack.c.b16 %v816, %v816
      %v849 = vpack.c.b16 %v817, %v817
      %v850 = vpack.c.b16 %v818, %v818
      %v851 = vpack.c.b16 %v819, %v819
      %v852 = vpack.c.b16 %v820, %v820
      %v853 = vpack.c.b16 %v821, %v821
      %v854 = vpack.c.b16 %v822, %v822
      %v855 = vpack.c.b16 %v823, %v823
      %v856 = vpack.c.b16 %v824, %v824
      %v857 = vpack.c.b16 %v825, %v825
      %v858 = vpack.c.b16 %v826, %v826
      %v859 = vpack.c.b16 %v827, %v827
      %v860 = vpack.c.b16 %v828, %v828
      %v861 = vpack.c.b16 %v829, %v829
      %v862 = vpack.c.b16 %v830, %v830
      %v863 = vpack.c.b16 %v831, %v831
      %v864 = vpack.c.b16 %v832, %v832
      %v865 = vpack.c.b16 %v833, %v833
      %v866 = vpack.c.b16 %v834, %v834
      %v867 = vpack.c.b16 %v835, %v835
      %vm900 = vcmask 60416
      %901 = vst.msk [vmem:[%s295] sm:$0xf] %vm900, %v836
      %902 = vst.msk [vmem:[%s295 + $0x4] sm:$0xf] %vm900, %v837
      %903 = vst.msk [vmem:[%s295 + $0x8] sm:$0xf] %vm900, %v838
      %904 = vst.msk [vmem:[%s295 + $0xc] sm:$0xf] %vm900, %v839
      %905 = vst.msk [vmem:[%s295 + $0x10] sm:$0xf] %vm900, %v840
      %906 = vst.msk [vmem:[%s295 + $0x14] sm:$0xf] %vm900, %v841
      %907 = vst.msk [vmem:[%s295 + $0x18] sm:$0xf] %vm900, %v842
      %908 = vst.msk [vmem:[%s295 + $0x1c] sm:$0xf] %vm900, %v843
      %909 = vst.msk [vmem:[%s295 + $0x20] sm:$0xf] %vm900, %v844
      %910 = vst.msk [vmem:[%s295 + $0x24] sm:$0xf] %vm900, %v845
      %911 = vst.msk [vmem:[%s295 + $0x28] sm:$0xf] %vm900, %v846
      %912 = vst.msk [vmem:[%s295 + $0x2c] sm:$0xf] %vm900, %v847
      %913 = vst.msk [vmem:[%s295 + $0x30] sm:$0xf] %vm900, %v848
      %914 = vst.msk [vmem:[%s295 + $0x34] sm:$0xf] %vm900, %v849
      %915 = vst.msk [vmem:[%s295 + $0x38] sm:$0xf] %vm900, %v850
      %916 = vst.msk [vmem:[%s295 + $0x3c] sm:$0xf] %vm900, %v851
      %917 = vst.msk [vmem:[%s295 + $0x40] sm:$0xf] %vm900, %v852
      %918 = vst.msk [vmem:[%s295 + $0x44] sm:$0xf] %vm900, %v853
      %919 = vst.msk [vmem:[%s295 + $0x48] sm:$0xf] %vm900, %v854
      %920 = vst.msk [vmem:[%s295 + $0x4c] sm:$0xf] %vm900, %v855
      %921 = vst.msk [vmem:[%s295 + $0x50] sm:$0xf] %vm900, %v856
      %922 = vst.msk [vmem:[%s295 + $0x54] sm:$0xf] %vm900, %v857
      %923 = vst.msk [vmem:[%s295 + $0x58] sm:$0xf] %vm900, %v858
      %924 = vst.msk [vmem:[%s295 + $0x5c] sm:$0xf] %vm900, %v859
      %925 = vst.msk [vmem:[%s295 + $0x60] sm:$0xf] %vm900, %v860
      %926 = vst.msk [vmem:[%s295 + $0x64] sm:$0xf] %vm900, %v861
      %927 = vst.msk [vmem:[%s295 + $0x68] sm:$0xf] %vm900, %v862
      %928 = vst.msk [vmem:[%s295 + $0x6c] sm:$0xf] %vm900, %v863
      %929 = vst.msk [vmem:[%s295 + $0x70] sm:$0xf] %vm900, %v864
      %930 = vst.msk [vmem:[%s295 + $0x74] sm:$0xf] %vm900, %v865
      %931 = vst.msk [vmem:[%s295 + $0x78] sm:$0xf] %vm900, %v866
      %932 = vst.msk [vmem:[%s295 + $0x7c] sm:$0xf] %vm900, %v867
      %v933 = vpack.c.bf16 %v521, %v518
      %v934 = vpack.c.bf16 %v529, %v526
      %v935 = vpack.c.bf16 %v537, %v534
      %v936 = vpack.c.bf16 %v545, %v542
      %v937 = vpack.c.bf16 %v553, %v550
      %v938 = vpack.c.bf16 %v561, %v558
      %v939 = vpack.c.bf16 %v569, %v566
      %v940 = vpack.c.bf16 %v577, %v574
      %v941 = vpack.c.bf16 %v585, %v582
      %v942 = vpack.c.bf16 %v593, %v590
      %v943 = vpack.c.bf16 %v601, %v598
      %v944 = vpack.c.bf16 %v609, %v606
      %v945 = vpack.c.bf16 %v617, %v614
      %v946 = vpack.c.bf16 %v625, %v622
      %v947 = vpack.c.bf16 %v633, %v630
      %v948 = vpack.c.bf16 %v641, %v638
      %v965 = vunpack.c.l.b16 %v933
      %v966 = vunpack.c.h.b16 %v933
      %v967 = vunpack.c.l.b16 %v934
      %v968 = vunpack.c.h.b16 %v934
      %v969 = vunpack.c.l.b16 %v935
      %v970 = vunpack.c.h.b16 %v935
      %v971 = vunpack.c.l.b16 %v936
      %v972 = vunpack.c.h.b16 %v936
      %v973 = vunpack.c.l.b16 %v937
      %v974 = vunpack.c.h.b16 %v937
      %v975 = vunpack.c.l.b16 %v938
      %v976 = vunpack.c.h.b16 %v938
      %v977 = vunpack.c.l.b16 %v939
      %v978 = vunpack.c.h.b16 %v939
      %v979 = vunpack.c.l.b16 %v940
      %v980 = vunpack.c.h.b16 %v940
      %v981 = vunpack.c.l.b16 %v941
      %v982 = vunpack.c.h.b16 %v941
      %v983 = vunpack.c.l.b16 %v942
      %v984 = vunpack.c.h.b16 %v942
      %v985 = vunpack.c.l.b16 %v943
      %v986 = vunpack.c.h.b16 %v943
      %v987 = vunpack.c.l.b16 %v944
      %v988 = vunpack.c.h.b16 %v944
      %v989 = vunpack.c.l.b16 %v945
      %v990 = vunpack.c.h.b16 %v945
      %v991 = vunpack.c.l.b16 %v946
      %v992 = vunpack.c.h.b16 %v946
      %v993 = vunpack.c.l.b16 %v947
      %v994 = vunpack.c.h.b16 %v947
      %v995 = vunpack.c.l.b16 %v948
      %v996 = vunpack.c.h.b16 %v948
      %v997 = vpack.c.b16 %v965, %v965
      %v998 = vpack.c.b16 %v966, %v966
      %v999 = vpack.c.b16 %v967, %v967
      %v1000 = vpack.c.b16 %v968, %v968
      %v1001 = vpack.c.b16 %v969, %v969
      %v1002 = vpack.c.b16 %v970, %v970
      %v1003 = vpack.c.b16 %v971, %v971
      %v1004 = vpack.c.b16 %v972, %v972
      %v1005 = vpack.c.b16 %v973, %v973
      %v1006 = vpack.c.b16 %v974, %v974
      %v1007 = vpack.c.b16 %v975, %v975
      %v1008 = vpack.c.b16 %v976, %v976
      %v1009 = vpack.c.b16 %v977, %v977
      %v1010 = vpack.c.b16 %v978, %v978
      %v1011 = vpack.c.b16 %v979, %v979
      %v1012 = vpack.c.b16 %v980, %v980
      %v1013 = vpack.c.b16 %v981, %v981
      %v1014 = vpack.c.b16 %v982, %v982
      %v1015 = vpack.c.b16 %v983, %v983
      %v1016 = vpack.c.b16 %v984, %v984
      %v1017 = vpack.c.b16 %v985, %v985
      %v1018 = vpack.c.b16 %v986, %v986
      %v1019 = vpack.c.b16 %v987, %v987
      %v1020 = vpack.c.b16 %v988, %v988
      %v1021 = vpack.c.b16 %v989, %v989
      %v1022 = vpack.c.b16 %v990, %v990
      %v1023 = vpack.c.b16 %v991, %v991
      %v1024 = vpack.c.b16 %v992, %v992
      %v1025 = vpack.c.b16 %v993, %v993
      %v1026 = vpack.c.b16 %v994, %v994
      %v1027 = vpack.c.b16 %v995, %v995
      %v1028 = vpack.c.b16 %v996, %v996
      %1029 = vrot.lane.b32.xlu0 %v997, 120
      %v1030 = vpop.permute.xlu0 %1029
      %1031 = vrot.lane.b32.xlu0 %v998, 120
      %v1032 = vpop.permute.xlu0 %1031
      %1033 = vrot.lane.b32.xlu0 %v999, 120
      %v1034 = vpop.permute.xlu0 %1033
      %1035 = vrot.lane.b32.xlu0 %v1000, 120
      %v1036 = vpop.permute.xlu0 %1035
      %1037 = vrot.lane.b32.xlu0 %v1001, 120
      %v1038 = vpop.permute.xlu0 %1037
      %1039 = vrot.lane.b32.xlu0 %v1002, 120
      %v1040 = vpop.permute.xlu0 %1039
      %1041 = vrot.lane.b32.xlu0 %v1003, 120
      %v1042 = vpop.permute.xlu0 %1041
      %1043 = vrot.lane.b32.xlu0 %v1004, 120
      %v1044 = vpop.permute.xlu0 %1043
      %1045 = vrot.lane.b32.xlu0 %v1005, 120
      %v1046 = vpop.permute.xlu0 %1045
      %1047 = vrot.lane.b32.xlu0 %v1006, 120
      %v1048 = vpop.permute.xlu0 %1047
      %1049 = vrot.lane.b32.xlu0 %v1007, 120
      %v1050 = vpop.permute.xlu0 %1049
      %1051 = vrot.lane.b32.xlu0 %v1008, 120
      %v1052 = vpop.permute.xlu0 %1051
      %1053 = vrot.lane.b32.xlu0 %v1009, 120
      %v1054 = vpop.permute.xlu0 %1053
      %1055 = vrot.lane.b32.xlu0 %v1010, 120
      %v1056 = vpop.permute.xlu0 %1055
      %1057 = vrot.lane.b32.xlu0 %v1011, 120
      %v1058 = vpop.permute.xlu0 %1057
      %1059 = vrot.lane.b32.xlu0 %v1012, 120
      %v1060 = vpop.permute.xlu0 %1059
      %1061 = vrot.lane.b32.xlu0 %v1013, 120
      %v1062 = vpop.permute.xlu0 %1061
      %1063 = vrot.lane.b32.xlu0 %v1014, 120
      %v1064 = vpop.permute.xlu0 %1063
      %1065 = vrot.lane.b32.xlu0 %v1015, 120
      %v1066 = vpop.permute.xlu0 %1065
      %1067 = vrot.lane.b32.xlu0 %v1016, 120
      %v1068 = vpop.permute.xlu0 %1067
      %1069 = vrot.lane.b32.xlu0 %v1017, 120
      %v1070 = vpop.permute.xlu0 %1069
      %1071 = vrot.lane.b32.xlu0 %v1018, 120
      %v1072 = vpop.permute.xlu0 %1071
      %1073 = vrot.lane.b32.xlu0 %v1019, 120
      %v1074 = vpop.permute.xlu0 %1073
      %1075 = vrot.lane.b32.xlu0 %v1020, 120
      %v1076 = vpop.permute.xlu0 %1075
      %1077 = vrot.lane.b32.xlu0 %v1021, 120
      %v1078 = vpop.permute.xlu0 %1077
      %1079 = vrot.lane.b32.xlu0 %v1022, 120
      %v1080 = vpop.permute.xlu0 %1079
      %1081 = vrot.lane.b32.xlu0 %v1023, 120
      %v1082 = vpop.permute.xlu0 %1081
      %1083 = vrot.lane.b32.xlu0 %v1024, 120
      %v1084 = vpop.permute.xlu0 %1083
      %1085 = vrot.lane.b32.xlu0 %v1025, 120
      %v1086 = vpop.permute.xlu0 %1085
      %1087 = vrot.lane.b32.xlu0 %v1026, 120
      %v1088 = vpop.permute.xlu0 %1087
      %1089 = vrot.lane.b32.xlu0 %v1027, 120
      %v1090 = vpop.permute.xlu0 %1089
      %1091 = vrot.lane.b32.xlu0 %v1028, 120
      %v1092 = vpop.permute.xlu0 %1091
      %1125 = vst.msk [vmem:[%s301] sm:$0xf] %vm900, %v1030
      %1126 = vst.msk [vmem:[%s301 + $0x4] sm:$0xf] %vm900, %v1032
      %1127 = vst.msk [vmem:[%s301 + $0x8] sm:$0xf] %vm900, %v1034
      %1128 = vst.msk [vmem:[%s301 + $0xc] sm:$0xf] %vm900, %v1036
      %1129 = vst.msk [vmem:[%s301 + $0x10] sm:$0xf] %vm900, %v1038
      %1130 = vst.msk [vmem:[%s301 + $0x14] sm:$0xf] %vm900, %v1040
      %1131 = vst.msk [vmem:[%s301 + $0x18] sm:$0xf] %vm900, %v1042
      %1132 = vst.msk [vmem:[%s301 + $0x1c] sm:$0xf] %vm900, %v1044
      %1133 = vst.msk [vmem:[%s301 + $0x20] sm:$0xf] %vm900, %v1046
      %1134 = vst.msk [vmem:[%s301 + $0x24] sm:$0xf] %vm900, %v1048
      %1135 = vst.msk [vmem:[%s301 + $0x28] sm:$0xf] %vm900, %v1050
      %1136 = vst.msk [vmem:[%s301 + $0x2c] sm:$0xf] %vm900, %v1052
      %1137 = vst.msk [vmem:[%s301 + $0x30] sm:$0xf] %vm900, %v1054
      %1138 = vst.msk [vmem:[%s301 + $0x34] sm:$0xf] %vm900, %v1056
      %1139 = vst.msk [vmem:[%s301 + $0x38] sm:$0xf] %vm900, %v1058
      %1140 = vst.msk [vmem:[%s301 + $0x3c] sm:$0xf] %vm900, %v1060
      %1141 = vst.msk [vmem:[%s301 + $0x40] sm:$0xf] %vm900, %v1062
      %1142 = vst.msk [vmem:[%s301 + $0x44] sm:$0xf] %vm900, %v1064
      %1143 = vst.msk [vmem:[%s301 + $0x48] sm:$0xf] %vm900, %v1066
      %1144 = vst.msk [vmem:[%s301 + $0x4c] sm:$0xf] %vm900, %v1068
      %1145 = vst.msk [vmem:[%s301 + $0x50] sm:$0xf] %vm900, %v1070
      %1146 = vst.msk [vmem:[%s301 + $0x54] sm:$0xf] %vm900, %v1072
      %1147 = vst.msk [vmem:[%s301 + $0x58] sm:$0xf] %vm900, %v1074
      %1148 = vst.msk [vmem:[%s301 + $0x5c] sm:$0xf] %vm900, %v1076
      %1149 = vst.msk [vmem:[%s301 + $0x60] sm:$0xf] %vm900, %v1078
      %1150 = vst.msk [vmem:[%s301 + $0x64] sm:$0xf] %vm900, %v1080
      %1151 = vst.msk [vmem:[%s301 + $0x68] sm:$0xf] %vm900, %v1082
      %1152 = vst.msk [vmem:[%s301 + $0x6c] sm:$0xf] %vm900, %v1084
      %1153 = vst.msk [vmem:[%s301 + $0x70] sm:$0xf] %vm900, %v1086
      %1154 = vst.msk [vmem:[%s301 + $0x74] sm:$0xf] %vm900, %v1088
      %1155 = vst.msk [vmem:[%s301 + $0x78] sm:$0xf] %vm900, %v1090
      %1156 = vst.msk [vmem:[%s301 + $0x7c] sm:$0xf] %vm900, %v1092
      %1157 = vrot.lane.b32.xlu0 %v997, 112
      %v1158 = vpop.permute.xlu0 %1157
      %1159 = vrot.lane.b32.xlu0 %v998, 112
      %v1160 = vpop.permute.xlu0 %1159
      %1161 = vrot.lane.b32.xlu0 %v999, 112
      %v1162 = vpop.permute.xlu0 %1161
      %1163 = vrot.lane.b32.xlu0 %v1000, 112
      %v1164 = vpop.permute.xlu0 %1163
      %1165 = vrot.lane.b32.xlu0 %v1001, 112
      %v1166 = vpop.permute.xlu0 %1165
      %1167 = vrot.lane.b32.xlu0 %v1002, 112
      %v1168 = vpop.permute.xlu0 %1167
      %1169 = vrot.lane.b32.xlu0 %v1003, 112
      %v1170 = vpop.permute.xlu0 %1169
      %1171 = vrot.lane.b32.xlu0 %v1004, 112
      %v1172 = vpop.permute.xlu0 %1171
      %1173 = vrot.lane.b32.xlu0 %v1005, 112
      %v1174 = vpop.permute.xlu0 %1173
      %1175 = vrot.lane.b32.xlu0 %v1006, 112
      %v1176 = vpop.permute.xlu0 %1175
      %1177 = vrot.lane.b32.xlu0 %v1007, 112
      %v1178 = vpop.permute.xlu0 %1177
      %1179 = vrot.lane.b32.xlu0 %v1008, 112
      %v1180 = vpop.permute.xlu0 %1179
      %1181 = vrot.lane.b32.xlu0 %v1009, 112
      %v1182 = vpop.permute.xlu0 %1181
      %1183 = vrot.lane.b32.xlu0 %v1010, 112
      %v1184 = vpop.permute.xlu0 %1183
      %1185 = vrot.lane.b32.xlu0 %v1011, 112
      %v1186 = vpop.permute.xlu0 %1185
      %1187 = vrot.lane.b32.xlu0 %v1012, 112
      %v1188 = vpop.permute.xlu0 %1187
      %1189 = vrot.lane.b32.xlu0 %v1013, 112
      %v1190 = vpop.permute.xlu0 %1189
      %1191 = vrot.lane.b32.xlu0 %v1014, 112
      %v1192 = vpop.permute.xlu0 %1191
      %1193 = vrot.lane.b32.xlu0 %v1015, 112
      %v1194 = vpop.permute.xlu0 %1193
      %1195 = vrot.lane.b32.xlu0 %v1016, 112
      %v1196 = vpop.permute.xlu0 %1195
      %1197 = vrot.lane.b32.xlu0 %v1017, 112
      %v1198 = vpop.permute.xlu0 %1197
      %1199 = vrot.lane.b32.xlu0 %v1018, 112
      %v1200 = vpop.permute.xlu0 %1199
      %1201 = vrot.lane.b32.xlu0 %v1019, 112
      %v1202 = vpop.permute.xlu0 %1201
      %1203 = vrot.lane.b32.xlu0 %v1020, 112
      %v1204 = vpop.permute.xlu0 %1203
      %1205 = vrot.lane.b32.xlu0 %v1021, 112
      %v1206 = vpop.permute.xlu0 %1205
      %1207 = vrot.lane.b32.xlu0 %v1022, 112
      %v1208 = vpop.permute.xlu0 %1207
      %1209 = vrot.lane.b32.xlu0 %v1023, 112
      %v1210 = vpop.permute.xlu0 %1209
      %1211 = vrot.lane.b32.xlu0 %v1024, 112
      %v1212 = vpop.permute.xlu0 %1211
      %1213 = vrot.lane.b32.xlu0 %v1025, 112
      %v1214 = vpop.permute.xlu0 %1213
      %1215 = vrot.lane.b32.xlu0 %v1026, 112
      %v1216 = vpop.permute.xlu0 %1215
      %1217 = vrot.lane.b32.xlu0 %v1027, 112
      %v1218 = vpop.permute.xlu0 %1217
      %1219 = vrot.lane.b32.xlu0 %v1028, 112
      %v1220 = vpop.permute.xlu0 %1219
      %1253 = vst.msk [vmem:[%s307] sm:$0xf] %vm900, %v1158
      %1254 = vst.msk [vmem:[%s307 + $0x4] sm:$0xf] %vm900, %v1160
      %1255 = vst.msk [vmem:[%s307 + $0x8] sm:$0xf] %vm900, %v1162
      %1256 = vst.msk [vmem:[%s307 + $0xc] sm:$0xf] %vm900, %v1164
      %1257 = vst.msk [vmem:[%s307 + $0x10] sm:$0xf] %vm900, %v1166
      %1258 = vst.msk [vmem:[%s307 + $0x14] sm:$0xf] %vm900, %v1168
      %1259 = vst.msk [vmem:[%s307 + $0x18] sm:$0xf] %vm900, %v1170
      %1260 = vst.msk [vmem:[%s307 + $0x1c] sm:$0xf] %vm900, %v1172
      %1261 = vst.msk [vmem:[%s307 + $0x20] sm:$0xf] %vm900, %v1174
      %1262 = vst.msk [vmem:[%s307 + $0x24] sm:$0xf] %vm900, %v1176
      %1263 = vst.msk [vmem:[%s307 + $0x28] sm:$0xf] %vm900, %v1178
      %1264 = vst.msk [vmem:[%s307 + $0x2c] sm:$0xf] %vm900, %v1180
      %1265 = vst.msk [vmem:[%s307 + $0x30] sm:$0xf] %vm900, %v1182
      %1266 = vst.msk [vmem:[%s307 + $0x34] sm:$0xf] %vm900, %v1184
      %1267 = vst.msk [vmem:[%s307 + $0x38] sm:$0xf] %vm900, %v1186
      %1268 = vst.msk [vmem:[%s307 + $0x3c] sm:$0xf] %vm900, %v1188
      %1269 = vst.msk [vmem:[%s307 + $0x40] sm:$0xf] %vm900, %v1190
      %1270 = vst.msk [vmem:[%s307 + $0x44] sm:$0xf] %vm900, %v1192
      %1271 = vst.msk [vmem:[%s307 + $0x48] sm:$0xf] %vm900, %v1194
      %1272 = vst.msk [vmem:[%s307 + $0x4c] sm:$0xf] %vm900, %v1196
      %1273 = vst.msk [vmem:[%s307 + $0x50] sm:$0xf] %vm900, %v1198
      %1274 = vst.msk [vmem:[%s307 + $0x54] sm:$0xf] %vm900, %v1200
      %1275 = vst.msk [vmem:[%s307 + $0x58] sm:$0xf] %vm900, %v1202
      %1276 = vst.msk [vmem:[%s307 + $0x5c] sm:$0xf] %vm900, %v1204
      %1277 = vst.msk [vmem:[%s307 + $0x60] sm:$0xf] %vm900, %v1206
      %1278 = vst.msk [vmem:[%s307 + $0x64] sm:$0xf] %vm900, %v1208
      %1279 = vst.msk [vmem:[%s307 + $0x68] sm:$0xf] %vm900, %v1210
      %1280 = vst.msk [vmem:[%s307 + $0x6c] sm:$0xf] %vm900, %v1212
      %1281 = vst.msk [vmem:[%s307 + $0x70] sm:$0xf] %vm900, %v1214
      %1282 = vst.msk [vmem:[%s307 + $0x74] sm:$0xf] %vm900, %v1216
      %1283 = vst.msk [vmem:[%s307 + $0x78] sm:$0xf] %vm900, %v1218
      %1284 = vst.msk [vmem:[%s307 + $0x7c] sm:$0xf] %vm900, %v1220
      %s1285 = smul.u32 32, %s19
      %p1286 = scmp.lt.s32.totalorder %s1285, 63
      %s1287 = scalar_select %p1286, %s1285, 63
      %s1288 = smul.addr %s1287, 4
      %s1289 = scalar_lea.vmem %s5, %s1288
      %s1290 = smul.u32 32, %s19
      %p1291 = scmp.lt.s32.totalorder %s1290, 63
      %s1292 = scalar_select %p1291, %s1290, 63
      %s1293 = smul.addr %s1292, 4
      %s1294 = scalar_lea.vmem %s6, %s1293
      %s1295 = smul.u32 32, %s19
      %p1296 = scmp.lt.s32.totalorder %s1295, 63
      %s1297 = scalar_select %p1296, %s1295, 63
      %s1298 = smul.addr %s1297, 4
      %s1299 = scalar_lea.vmem %s7, %s1298
      // Predicated region
      $region41: #{tcn_gcn_unit_forward.3} parent=39 // pred_check
        %p1300 = pneg %p147
      $region42: #{tcn_gcn_unit_forward.3} parent=39 // pred_check_branch
        %1302 = sbr.rel (%p1300) target = $region44
      $region43: #{tcn_gcn_unit_forward.3} parent=39 // pred_region
        %s1303 = smul.u32 32, %s19
      $region44: #{tcn_gcn_unit_forward.3} parent=39 // pred_fallthru
        _
      // Predicated region
      $region45: #{tcn_gcn_unit_forward.3} parent=39 // pred_check
        %p1304 = pneg %p173
      $region46: #{tcn_gcn_unit_forward.3} parent=39 // pred_check_branch
        %1306 = sbr.rel (%p1304) target = $region48
      $region47: #{tcn_gcn_unit_forward.3} parent=39 // pred_region
        %s1307 = smul.u32 32, %s19
      $region48: #{tcn_gcn_unit_forward.3} parent=39 // pred_fallthru
        _
      // Predicated region
      $region49: #{tcn_gcn_unit_forward.3} parent=39 // pred_check
        %p1308 = pneg %p199
      $region50: #{tcn_gcn_unit_forward.3} parent=39 // pred_check_branch
        %1310 = sbr.rel (%p1308) target = $region52
      $region51: #{tcn_gcn_unit_forward.3} parent=39 // pred_region
        %s1311 = smul.u32 32, %s19
      $region52: #{tcn_gcn_unit_forward.3} parent=39 // pred_fallthru
        _
    $region40: #{tcn_gcn_unit_forward.3} parent=5 // pred_fallthru
      _
    %p1312 = scmp.le.s32.totalorder 2, %s14
    // Predicated region
    $region53: #{tcn_gcn_unit_forward.3} parent=5 // pred_check
      %p1313 = pneg %p1312
    $region54: #{tcn_gcn_unit_forward.3} parent=5 // pred_check_branch
      %1315 = sbr.rel (%p1313) target = $region56
    $region55: #{tcn_gcn_unit_forward.3} parent=5 // pred_region
      %s1316 = ssub.s32 %s14, 2
      // Predicated region
      $region57: #{tcn_gcn_unit_forward.3} parent=55 // pred_check
        %p1317 = pneg %p153
      $region58: #{tcn_gcn_unit_forward.3} parent=55 // pred_check_branch
        %1319 = sbr.rel (%p1317) target = $region60
      $region59: #{tcn_gcn_unit_forward.3} parent=55 // pred_region
        %s1320 = smul.u32 32, %s20
        %p1321 = scmp.lt.s32.totalorder %s1320, 63
        %s1322 = scalar_select %p1321, %s1320, 63
        %s1323 = smul.addr %s1322, 4
        %s1324 = scalar_lea.vmem %s5, %s1323
      $region60: #{tcn_gcn_unit_forward.3} parent=55 // pred_fallthru
        _
      // Predicated region
      $region61: #{tcn_gcn_unit_forward.3} parent=55 // pred_check
        %p1325 = pneg %p179
      $region62: #{tcn_gcn_unit_forward.3} parent=55 // pred_check_branch
        %1327 = sbr.rel (%p1325) target = $region64
      $region63: #{tcn_gcn_unit_forward.3} parent=55 // pred_region
        %s1328 = smul.u32 32, %s20
        %p1329 = scmp.lt.s32.totalorder %s1328, 63
        %s1330 = scalar_select %p1329, %s1328, 63
        %s1331 = smul.addr %s1330, 4
        %s1332 = scalar_lea.vmem %s6, %s1331
      $region64: #{tcn_gcn_unit_forward.3} parent=55 // pred_fallthru
        _
      // Predicated region
      $region65: #{tcn_gcn_unit_forward.3} parent=55 // pred_check
        %p1333 = pneg %p205
      $region66: #{tcn_gcn_unit_forward.3} parent=55 // pred_check_branch
        %1335 = sbr.rel (%p1333) target = $region68
      $region67: #{tcn_gcn_unit_forward.3} parent=55 // pred_region
        %s1336 = smul.u32 32, %s20
        %p1337 = scmp.lt.s32.totalorder %s1336, 63
        %s1338 = scalar_select %p1337, %s1336, 63
        %s1339 = smul.addr %s1338, 4
        %s1340 = scalar_lea.vmem %s7, %s1339
      $region68: #{tcn_gcn_unit_forward.3} parent=55 // pred_fallthru
        _
    $region56: #{tcn_gcn_unit_forward.3} parent=5 // pred_fallthru
      _
  $region6: #{tcn_gcn_unit_forward.3} parent=0 // loop_footer
    %s18 = sadd.s32 1, %s14
  $region7: #{tcn_gcn_unit_forward.3} parent=0 // loop_footer_branch
    %13 = sbr.rel target = $region3
  $region8: #{tcn_gcn_unit_forward.3} parent=0 // loop_exit
    _

// kernel: tcn_gcn_unit_forward.4
$region0: #{tcn_gcn_unit_forward.4}
  #allocation0 [shape = 'u32[]', space=smem, size = 0x4, offset = 0x4, fixed_abs, tag = 'smem constant byte address 0x4 - core index']
  #allocation1 [shape = 'u32[144,128]{1,0:T(1,128)}', space=vmem, size = 0x12000, scoped, tag = 'internal scratch']
  %s0 = inlined_call_operand.vmem [shape: bf16[512,8], index: 0, kind: input, shape index: {}]
  %s1 = inlined_call_operand.vmem [shape: bf16[8,8], index: 1, kind: input, shape index: {}]
  %s2 = inlined_call_operand.vmem [shape: f32[1,8], index: 2, kind: input, shape index: {}]
  %s3 = inlined_call_operand.vmem [shape: bf16[512,8], index: 3, kind: output, shape index: {}]
  %s4 = sld [smem:[#allocation0]]
  $region45: #{tcn_gcn_unit_forward.4} parent=0
    _
  %s6 = ssub.s32 1, %s4
  %s7 = scalar_select 0, %s6, %s4
  loop: start=0, step=1, limit=4
  $region2: #{tcn_gcn_unit_forward.4} parent=0 // loop_pre_header
    _
  $region3: #{tcn_gcn_unit_forward.4} parent=0 // loop_header
    %s9 = sphi 0, %s13
    %p10 = scmp.ge.s32.totalorder %s9, 4
    %s19 = sphi 0, %s21
    %s22 = sphi 0, %s19
    %s23 = sphi 0, %s22
    %s39 = sphi 0, %s23
    %s43 = sphi 0, %s43
    %s45 = sphi 0, %s43
    %s46 = sphi 0, %s45
    %s60 = sphi 0, %s46
    %s64 = sphi 0, %s64
    %s66 = sphi 0, %s64
    %s67 = sphi 0, %s66
    %s81 = sphi 0, %s67
    %s87 = sphi 0, %s89
    %s90 = sphi 0, %s87
    %s91 = sphi 0, %s90
    %s107 = sphi 0, %s91
  $region4: #{tcn_gcn_unit_forward.4} parent=0 // loop_header_branch
    %12 = sbr.rel (%p10) target = $region8
  $region5: #{tcn_gcn_unit_forward.4} parent=0 // loop_body
    %s14 = ssub.s32 %s9, 1
    %s15 = ssub.s32 %s9, 2
    %s16 = sadd.s32 %s9, 1
    %s17 = ssub.s32 %s9, %s16
    %p18 = scmp.eq.s32.totalorder %s17, 0
    %s20 = sadd.s32 %s19, 1
    %s21 = scalar_select %p18, %s19, %s20
    %p24 = pneg %p18
    %p25 = scmp.eq.s32.totalorder %s9, 1
    %p26 = por %p24, %p25
    %p27 = scmp.ne.s32.totalorder %s19, %s22
    %p28 = scmp.eq.s32.totalorder %s9, 0
    %p29 = por %p27, %p28
    %p30 = scmp.ne.s32.totalorder %s19, %s22
    %p31 = scmp.eq.s32.totalorder %s14, 1
    %p32 = por %p30, %p31
    %p33 = scmp.ne.s32.totalorder %s22, %s23
    %p34 = scmp.eq.s32.totalorder %s14, 0
    %p35 = por %p33, %p34
    %p36 = scmp.ne.s32.totalorder %s22, %s23
    %p37 = scmp.eq.s32.totalorder %s15, 1
    %p38 = por %p36, %p37
    %p40 = scmp.ne.s32.totalorder %s23, %s39
    %p41 = scmp.eq.s32.totalorder %s15, 0
    %p42 = por %p40, %p41
    %s44 = sadd.s32 %s43, 1
    %p47 = scmp.eq.s32.totalorder %s9, 1
    %p48 = scmp.ne.s32.totalorder %s43, %s45
    %p49 = scmp.eq.s32.totalorder %s9, 0
    %p50 = por %p48, %p49
    %p51 = scmp.ne.s32.totalorder %s43, %s45
    %p52 = scmp.eq.s32.totalorder %s14, 1
    %p53 = por %p51, %p52
    %p54 = scmp.ne.s32.totalorder %s45, %s46
    %p55 = scmp.eq.s32.totalorder %s14, 0
    %p56 = por %p54, %p55
    %p57 = scmp.ne.s32.totalorder %s45, %s46
    %p58 = scmp.eq.s32.totalorder %s15, 1
    %p59 = por %p57, %p58
    %p61 = scmp.ne.s32.totalorder %s46, %s60
    %p62 = scmp.eq.s32.totalorder %s15, 0
    %p63 = por %p61, %p62
    %s65 = sadd.s32 %s64, 1
    %p68 = scmp.eq.s32.totalorder %s9, 1
    %p69 = scmp.ne.s32.totalorder %s64, %s66
    %p70 = scmp.eq.s32.totalorder %s9, 0
    %p71 = por %p69, %p70
    %p72 = scmp.ne.s32.totalorder %s64, %s66
    %p73 = scmp.eq.s32.totalorder %s14, 1
    %p74 = por %p72, %p73
    %p75 = scmp.ne.s32.totalorder %s66, %s67
    %p76 = scmp.eq.s32.totalorder %s14, 0
    %p77 = por %p75, %p76
    %p78 = scmp.ne.s32.totalorder %s66, %s67
    %p79 = scmp.eq.s32.totalorder %s15, 1
    %p80 = por %p78, %p79
    %p82 = scmp.ne.s32.totalorder %s67, %s81
    %p83 = scmp.eq.s32.totalorder %s15, 0
    %p84 = por %p82, %p83
    %s85 = ssub.s32 %s9, %s16
    %p86 = scmp.eq.s32.totalorder %s85, 0
    %s88 = sadd.s32 %s87, 1
    %s89 = scalar_select %p86, %s87, %s88
    %p92 = pneg %p86
    %p93 = scmp.eq.s32.totalorder %s9, 1
    %p94 = por %p92, %p93
    %p95 = scmp.ne.s32.totalorder %s87, %s90
    %p96 = scmp.eq.s32.totalorder %s9, 0
    %p97 = por %p95, %p96
    %p98 = scmp.ne.s32.totalorder %s87, %s90
    %p99 = scmp.eq.s32.totalorder %s14, 1
    %p100 = por %p98, %p99
    %p101 = scmp.ne.s32.totalorder %s90, %s91
    %p102 = scmp.eq.s32.totalorder %s14, 0
    %p103 = por %p101, %p102
    %p104 = scmp.ne.s32.totalorder %s90, %s91
    %p105 = scmp.eq.s32.totalorder %s15, 1
    %p106 = por %p104, %p105
    %p108 = scmp.ne.s32.totalorder %s91, %s107
    %p109 = scmp.eq.s32.totalorder %s15, 0
    %p110 = por %p108, %p109
    %p111 = scmp.le.s32.totalorder 1, %s9
    %p112 = scmp.lt.s32.totalorder %s9, 3
    %p113 = pnand %p111, %p112
    %p114 = pneg %p113
    // Predicated region
    $region9: #{tcn_gcn_unit_forward.4} parent=5 // pred_check
      _
    $region10: #{tcn_gcn_unit_forward.4} parent=5 // pred_check_branch
      %116 = sbr.rel (%p113) target = $region12
    $region11: #{tcn_gcn_unit_forward.4} parent=5 // pred_region
      %s117 = ssub.s32 %s9, 1
      // Predicated region
      $region13: #{tcn_gcn_unit_forward.4} parent=11 // pred_check
        %p118 = pneg %p56
      $region14: #{tcn_gcn_unit_forward.4} parent=11 // pred_check_branch
        %120 = sbr.rel (%p118) target = $region16
      $region15: #{tcn_gcn_unit_forward.4} parent=11 // pred_region
        _
      $region16: #{tcn_gcn_unit_forward.4} parent=11 // pred_fallthru
        _
      // Predicated region
      $region17: #{tcn_gcn_unit_forward.4} parent=11 // pred_check
        %p121 = pneg %p77
      $region18: #{tcn_gcn_unit_forward.4} parent=11 // pred_check_branch
        %123 = sbr.rel (%p121) target = $region20
      $region19: #{tcn_gcn_unit_forward.4} parent=11 // pred_region
        _
      $region20: #{tcn_gcn_unit_forward.4} parent=11 // pred_fallthru
        _
    $region12: #{tcn_gcn_unit_forward.4} parent=5 // pred_fallthru
      _
    %p124 = scmp.lt.s32.totalorder %s9, 2
    // Predicated region
    $region21: #{tcn_gcn_unit_forward.4} parent=5 // pred_check
      %p125 = pneg %p124
    $region22: #{tcn_gcn_unit_forward.4} parent=5 // pred_check_branch
      %127 = sbr.rel (%p125) target = $region24
    $region23: #{tcn_gcn_unit_forward.4} parent=5 // pred_region
      // Predicated region
      $region25: #{tcn_gcn_unit_forward.4} parent=23 // pred_check
        %p128 = pneg %p29
      $region26: #{tcn_gcn_unit_forward.4} parent=23 // pred_check_branch
        %130 = sbr.rel (%p128) target = $region28
      $region27: #{tcn_gcn_unit_forward.4} parent=23 // pred_region
        %s131 = smul.u32 32, %s9
        %p132 = scmp.lt.s32.totalorder %s131, 63
        %s133 = scalar_select %p132, %s131, 63
        %s134 = smul.addr %s133, 4
        %s135 = scalar_lea.vmem %s0, %s134
        %s136 = smul.u32 32, %s9
      $region28: #{tcn_gcn_unit_forward.4} parent=23 // pred_fallthru
        _
    $region24: #{tcn_gcn_unit_forward.4} parent=5 // pred_fallthru
      _
    %p137 = scmp.le.s32.totalorder 1, %s9
    %p138 = scmp.lt.s32.totalorder %s9, 3
    %p139 = pnand %p137, %p138
    %p140 = pneg %p139
    // Predicated region
    $region29: #{tcn_gcn_unit_forward.4} parent=5 // pred_check
      _
    $region30: #{tcn_gcn_unit_forward.4} parent=5 // pred_check_branch
      %142 = sbr.rel (%p139) target = $region32
    $region31: #{tcn_gcn_unit_forward.4} parent=5 // pred_region
      %s143 = ssub.s32 %s9, 1
      %s144 = smul.u32 32, %s14
      %p145 = scmp.lt.s32.totalorder %s144, 63
      %s146 = scalar_select %p145, %s144, 63
      %s147 = smul.addr %s146, 4
      %s148 = scalar_lea.vmem %s0, %s147
      %p149 = pneg %p35
      %p150 = pneg %p32
      %p151 = pneg %p56
      %p152 = pneg %p53
      %p153 = pneg %p77
      %p154 = pneg %p74
      %p155 = pneg %p103
      %p156 = pneg %p100
      %s157 = smul.u32 32, %s14
      %p158 = scmp.lt.s32.totalorder %s157, 63
      %s159 = scalar_select %p158, %s157, 63
      %s160 = smul.addr %s159, 4
      %s161 = scalar_lea.vmem %s3, %s160
      %s162 = smul.u32 32, %s14
      %p163 = scmp.lt.s32.totalorder %s162, 63
      %s164 = scalar_select %p163, %s162, 63
      %s165 = smul.addr %s164, 4
      %s166 = scalar_lea.vmem %s0, %s165
      %s167 = smul.u32 32, %s14
      %s168 = smul.u32 32, %s14
      %p169 = scmp.lt.s32.totalorder %s168, 63
      %s170 = scalar_select %p169, %s168, 63
      %s171 = smul.addr %s170, 4
      %s172 = scalar_lea.vmem %s3, %s171
      %s173 = smul.u32 32, %s14
      %v175 = vld [vmem:[%s166] sm:$0xf]
      %v176 = vld [vmem:[%s166 + $0x4] sm:$0xf]
      %v177 = vld [vmem:[%s166 + $0x8] sm:$0xf]
      %v178 = vld [vmem:[%s166 + $0xc] sm:$0xf]
      %v179 = vld [vmem:[%s166 + $0x10] sm:$0xf]
      %v180 = vld [vmem:[%s166 + $0x14] sm:$0xf]
      %v181 = vld [vmem:[%s166 + $0x18] sm:$0xf]
      %v182 = vld [vmem:[%s166 + $0x1c] sm:$0xf]
      %v183 = vld [vmem:[%s166 + $0x20] sm:$0xf]
      %v184 = vld [vmem:[%s166 + $0x24] sm:$0xf]
      %v185 = vld [vmem:[%s166 + $0x28] sm:$0xf]
      %v186 = vld [vmem:[%s166 + $0x2c] sm:$0xf]
      %v187 = vld [vmem:[%s166 + $0x30] sm:$0xf]
      %v188 = vld [vmem:[%s166 + $0x34] sm:$0xf]
      %v189 = vld [vmem:[%s166 + $0x38] sm:$0xf]
      %v190 = vld [vmem:[%s166 + $0x3c] sm:$0xf]
      %v191 = vld [vmem:[%s166 + $0x40] sm:$0xf]
      %v192 = vld [vmem:[%s166 + $0x44] sm:$0xf]
      %v193 = vld [vmem:[%s166 + $0x48] sm:$0xf]
      %v194 = vld [vmem:[%s166 + $0x4c] sm:$0xf]
      %v195 = vld [vmem:[%s166 + $0x50] sm:$0xf]
      %v196 = vld [vmem:[%s166 + $0x54] sm:$0xf]
      %v197 = vld [vmem:[%s166 + $0x58] sm:$0xf]
      %v198 = vld [vmem:[%s166 + $0x5c] sm:$0xf]
      %v199 = vld [vmem:[%s166 + $0x60] sm:$0xf]
      %v200 = vld [vmem:[%s166 + $0x64] sm:$0xf]
      %v201 = vld [vmem:[%s166 + $0x68] sm:$0xf]
      %v202 = vld [vmem:[%s166 + $0x6c] sm:$0xf]
      %v203 = vld [vmem:[%s166 + $0x70] sm:$0xf]
      %v204 = vld [vmem:[%s166 + $0x74] sm:$0xf]
      %v205 = vld [vmem:[%s166 + $0x78] sm:$0xf]
      %v206 = vld [vmem:[%s166 + $0x7c] sm:$0xf]
      %v207 = vld [vmem:[%s1] sm:$0xf]
      %v208 = vld [vmem:[%s2] sm:$0x1]
      %v210 = vlaneseq
      %v211 = vshrl.u32 %v210, 7
      %v212 = vsub.s32 0, %v211
      %v213 = vrot.slane %v208, %v212
      %v247 = vunpack.c.l.b16 %v175
      %v248 = vunpack.c.l.b16 %v176
      %v249 = vunpack.c.l.b16 %v177
      %v250 = vunpack.c.l.b16 %v178
      %v251 = vunpack.c.l.b16 %v179
      %v252 = vunpack.c.l.b16 %v180
      %v253 = vunpack.c.l.b16 %v181
      %v254 = vunpack.c.l.b16 %v182
      %v255 = vunpack.c.l.b16 %v183
      %v256 = vunpack.c.l.b16 %v184
      %v257 = vunpack.c.l.b16 %v185
      %v258 = vunpack.c.l.b16 %v186
      %v259 = vunpack.c.l.b16 %v187
      %v260 = vunpack.c.l.b16 %v188
      %v261 = vunpack.c.l.b16 %v189
      %v262 = vunpack.c.l.b16 %v190
      %v263 = vunpack.c.l.b16 %v191
      %v264 = vunpack.c.l.b16 %v192
      %v265 = vunpack.c.l.b16 %v193
      %v266 = vunpack.c.l.b16 %v194
      %v267 = vunpack.c.l.b16 %v195
      %v268 = vunpack.c.l.b16 %v196
      %v269 = vunpack.c.l.b16 %v197
      %v270 = vunpack.c.l.b16 %v198
      %v271 = vunpack.c.l.b16 %v199
      %v272 = vunpack.c.l.b16 %v200
      %v273 = vunpack.c.l.b16 %v201
      %v274 = vunpack.c.l.b16 %v202
      %v275 = vunpack.c.l.b16 %v203
      %v276 = vunpack.c.l.b16 %v204
      %v277 = vunpack.c.l.b16 %v205
      %v278 = vunpack.c.l.b16 %v206
      %v279 = vpack.c.b16 %v248, %v247
      %v280 = vpack.c.b16 %v250, %v249
      %v281 = vpack.c.b16 %v252, %v251
      %v282 = vpack.c.b16 %v254, %v253
      %v283 = vpack.c.b16 %v256, %v255
      %v284 = vpack.c.b16 %v258, %v257
      %v285 = vpack.c.b16 %v260, %v259
      %v286 = vpack.c.b16 %v262, %v261
      %v287 = vpack.c.b16 %v264, %v263
      %v288 = vpack.c.b16 %v266, %v265
      %v289 = vpack.c.b16 %v268, %v267
      %v290 = vpack.c.b16 %v270, %v269
      %v291 = vpack.c.b16 %v272, %v271
      %v292 = vpack.c.b16 %v274, %v273
      %v293 = vpack.c.b16 %v276, %v275
      %v294 = vpack.c.b16 %v278, %v277
      %vm295 = vcmask 64512
      %v297 = vsel %vm295, %v279, 0
      %v300 = vsel %vm295, %v280, 0
      %v303 = vsel %vm295, %v281, 0
      %v306 = vsel %vm295, %v282, 0
      %v309 = vsel %vm295, %v283, 0
      %v312 = vsel %vm295, %v284, 0
      %v315 = vsel %vm295, %v285, 0
      %v318 = vsel %vm295, %v286, 0
      %v321 = vsel %vm295, %v287, 0
      %v324 = vsel %vm295, %v288, 0
      %v327 = vsel %vm295, %v289, 0
      %v330 = vsel %vm295, %v290, 0
      %v333 = vsel %vm295, %v291, 0
      %v336 = vsel %vm295, %v292, 0
      %v339 = vsel %vm295, %v293, 0
      %v342 = vsel %vm295, %v294, 0
      %vm344 = vcmask 1043456
      %v346 = vsel %vm344, %v207, 0
      %348 = vmatprep.subr.bf16.mxu0 0
      %349 = vmatpush1.bf16.msra.mxu0 %v346
      %350 = vmatprep.subr.bf16.mxu0 0
      %351 = vmatpush1.bf16.msra.mxu0 0
      %352 = vmatprep.subr.bf16.mxu0 0
      %353 = vmatpush1.bf16.msra.mxu0 0
      %354 = vmatprep.subr.bf16.mxu0 0
      %355 = vmatpush1.bf16.msra.mxu0 0
      %356 = vmatprep.subr.bf16.mxu0 0
      %357 = vmatpush1.bf16.msra.mxu0 0
      %358 = vmatprep.subr.bf16.mxu0 0
      %359 = vmatpush1.bf16.msra.mxu0 0
      %360 = vmatprep.subr.bf16.mxu0 0
      %361 = vmatpush1.bf16.msra.mxu0 0
      %362 = vmatprep.subr.bf16.mxu0 0
      %363 = vmatpush1.bf16.msra.mxu0 0
      %364 = vmatprep.subr.bf16.mxu0 0
      %365 = vmatpush1.bf16.msra.mxu0 0
      %366 = vmatprep.subr.bf16.mxu0 0
      %367 = vmatpush1.bf16.msra.mxu0 0
      %368 = vmatprep.subr.bf16.mxu0 0
      %369 = vmatpush1.bf16.msra.mxu0 0
      %370 = vmatprep.subr.bf16.mxu0 0
      %371 = vmatpush1.bf16.msra.mxu0 0
      %372 = vmatprep.subr.bf16.mxu0 0
      %373 = vmatpush1.bf16.msra.mxu0 0
      %374 = vmatprep.subr.bf16.mxu0 0
      %375 = vmatpush1.bf16.msra.mxu0 0
      %376 = vmatprep.subr.bf16.mxu0 0
      %377 = vmatpush1.bf16.msra.mxu0 0
      %378 = vmatprep.subr.bf16.mxu0 0
      %379 = vmatpush1.bf16.msra.mxu0 0
      %380 = vmatprep.mubr.bf16.mxu0 0
      %381 = vmatmul.mubr.bf16.gmra.mrb[0].mxu0 %v297
      %v382 = vpop.f32.mrb[0].mxu0
      %v383 = vadd.f32 %v213, %v382
      %v384 = vpop.f32.mrb[0].mxu0
      %v385 = vpop.f32.mrb[0].mxu0
      %v386 = vadd.f32 %v213, %v385
      %v387 = vpop.f32.mrb[0].mxu0
      %388 = vmatprep.mubr.bf16.mxu0 0
      %389 = vmatmul.mubr.bf16.gmra.mrb[0].mxu0 %v300
      %v390 = vpop.f32.mrb[0].mxu0
      %v391 = vadd.f32 %v213, %v390
      %v392 = vpop.f32.mrb[0].mxu0
      %v393 = vpop.f32.mrb[0].mxu0
      %v394 = vadd.f32 %v213, %v393
      %v395 = vpop.f32.mrb[0].mxu0
      %396 = vmatprep.mubr.bf16.mxu0 0
      %397 = vmatmul.mubr.bf16.gmra.mrb[0].mxu0 %v303
      %v398 = vpop.f32.mrb[0].mxu0
      %v399 = vadd.f32 %v213, %v398
      %v400 = vpop.f32.mrb[0].mxu0
      %v401 = vpop.f32.mrb[0].mxu0
      %v402 = vadd.f32 %v213, %v401
      %v403 = vpop.f32.mrb[0].mxu0
      %404 = vmatprep.mubr.bf16.mxu0 0
      %405 = vmatmul.mubr.bf16.gmra.mrb[0].mxu0 %v306
      %v406 = vpop.f32.mrb[0].mxu0
      %v407 = vadd.f32 %v213, %v406
      %v408 = vpop.f32.mrb[0].mxu0
      %v409 = vpop.f32.mrb[0].mxu0
      %v410 = vadd.f32 %v213, %v409
      %v411 = vpop.f32.mrb[0].mxu0
      %412 = vmatprep.mubr.bf16.mxu0 0
      %413 = vmatmul.mubr.bf16.gmra.mrb[0].mxu0 %v309
      %v414 = vpop.f32.mrb[0].mxu0
      %v415 = vadd.f32 %v213, %v414
      %v416 = vpop.f32.mrb[0].mxu0
      %v417 = vpop.f32.mrb[0].mxu0
      %v418 = vadd.f32 %v213, %v417
      %v419 = vpop.f32.mrb[0].mxu0
      %420 = vmatprep.mubr.bf16.mxu0 0
      %421 = vmatmul.mubr.bf16.gmra.mrb[0].mxu0 %v312
      %v422 = vpop.f32.mrb[0].mxu0
      %v423 = vadd.f32 %v213, %v422
      %v424 = vpop.f32.mrb[0].mxu0
      %v425 = vpop.f32.mrb[0].mxu0
      %v426 = vadd.f32 %v213, %v425
      %v427 = vpop.f32.mrb[0].mxu0
      %428 = vmatprep.mubr.bf16.mxu0 0
      %429 = vmatmul.mubr.bf16.gmra.mrb[0].mxu0 %v315
      %v430 = vpop.f32.mrb[0].mxu0
      %v431 = vadd.f32 %v213, %v430
      %v432 = vpop.f32.mrb[0].mxu0
      %v433 = vpop.f32.mrb[0].mxu0
      %v434 = vadd.f32 %v213, %v433
      %v435 = vpop.f32.mrb[0].mxu0
      %436 = vmatprep.mubr.bf16.mxu0 0
      %437 = vmatmul.mubr.bf16.gmra.mrb[0].mxu0 %v318
      %v438 = vpop.f32.mrb[0].mxu0
      %v439 = vadd.f32 %v213, %v438
      %v440 = vpop.f32.mrb[0].mxu0
      %v441 = vpop.f32.mrb[0].mxu0
      %v442 = vadd.f32 %v213, %v441
      %v443 = vpop.f32.mrb[0].mxu0
      %444 = vmatprep.mubr.bf16.mxu0 0
      %445 = vmatmul.mubr.bf16.gmra.mrb[0].mxu0 %v321
      %v446 = vpop.f32.mrb[0].mxu0
      %v447 = vadd.f32 %v213, %v446
      %v448 = vpop.f32.mrb[0].mxu0
      %v449 = vpop.f32.mrb[0].mxu0
      %v450 = vadd.f32 %v213, %v449
      %v451 = vpop.f32.mrb[0].mxu0
      %452 = vmatprep.mubr.bf16.mxu0 0
      %453 = vmatmul.mubr.bf16.gmra.mrb[0].mxu0 %v324
      %v454 = vpop.f32.mrb[0].mxu0
      %v455 = vadd.f32 %v213, %v454
      %v456 = vpop.f32.mrb[0].mxu0
      %v457 = vpop.f32.mrb[0].mxu0
      %v458 = vadd.f32 %v213, %v457
      %v459 = vpop.f32.mrb[0].mxu0
      %460 = vmatprep.mubr.bf16.mxu0 0
      %461 = vmatmul.mubr.bf16.gmra.mrb[0].mxu0 %v327
      %v462 = vpop.f32.mrb[0].mxu0
      %v463 = vadd.f32 %v213, %v462
      %v464 = vpop.f32.mrb[0].mxu0
      %v465 = vpop.f32.mrb[0].mxu0
      %v466 = vadd.f32 %v213, %v465
      %v467 = vpop.f32.mrb[0].mxu0
      %468 = vmatprep.mubr.bf16.mxu0 0
      %469 = vmatmul.mubr.bf16.gmra.mrb[0].mxu0 %v330
      %v470 = vpop.f32.mrb[0].mxu0
      %v471 = vadd.f32 %v213, %v470
      %v472 = vpop.f32.mrb[0].mxu0
      %v473 = vpop.f32.mrb[0].mxu0
      %v474 = vadd.f32 %v213, %v473
      %v475 = vpop.f32.mrb[0].mxu0
      %476 = vmatprep.mubr.bf16.mxu0 0
      %477 = vmatmul.mubr.bf16.gmra.mrb[0].mxu0 %v333
      %v478 = vpop.f32.mrb[0].mxu0
      %v479 = vadd.f32 %v213, %v478
      %v480 = vpop.f32.mrb[0].mxu0
      %v481 = vpop.f32.mrb[0].mxu0
      %v482 = vadd.f32 %v213, %v481
      %v483 = vpop.f32.mrb[0].mxu0
      %484 = vmatprep.mubr.bf16.mxu0 0
      %485 = vmatmul.mubr.bf16.gmra.mrb[0].mxu0 %v336
      %v486 = vpop.f32.mrb[0].mxu0
      %v487 = vadd.f32 %v213, %v486
      %v488 = vpop.f32.mrb[0].mxu0
      %v489 = vpop.f32.mrb[0].mxu0
      %v490 = vadd.f32 %v213, %v489
      %v491 = vpop.f32.mrb[0].mxu0
      %492 = vmatprep.mubr.bf16.mxu0 0
      %493 = vmatmul.mubr.bf16.gmra.mrb[0].mxu0 %v339
      %v494 = vpop.f32.mrb[0].mxu0
      %v495 = vadd.f32 %v213, %v494
      %v496 = vpop.f32.mrb[0].mxu0
      %v497 = vpop.f32.mrb[0].mxu0
      %v498 = vadd.f32 %v213, %v497
      %v499 = vpop.f32.mrb[0].mxu0
      %500 = vmatprep.mubr.bf16.mxu0 0
      %501 = vmatmul.mubr.bf16.gmra.mrb[0].mxu0 %v342
      %v502 = vpop.f32.mrb[0].mxu0
      %v503 = vadd.f32 %v213, %v502
      %v504 = vpop.f32.mrb[0].mxu0
      %v505 = vpop.f32.mrb[0].mxu0
      %v506 = vadd.f32 %v213, %v505
      %v507 = vpop.f32.mrb[0].mxu0
      %508 = vdwg.mxu0
      %v509 = vmax.f32 %v383, 0.0
      %v510 = vmax.f32 %v386, 0.0
      %v511 = vmax.f32 %v391, 0.0
      %v512 = vmax.f32 %v394, 0.0
      %v513 = vmax.f32 %v399, 0.0
      %v514 = vmax.f32 %v402, 0.0
      %v515 = vmax.f32 %v407, 0.0
      %v516 = vmax.f32 %v410, 0.0
      %v517 = vmax.f32 %v415, 0.0
      %v518 = vmax.f32 %v418, 0.0
      %v519 = vmax.f32 %v423, 0.0
      %v520 = vmax.f32 %v426, 0.0
      %v521 = vmax.f32 %v431, 0.0
      %v522 = vmax.f32 %v434, 0.0
      %v523 = vmax.f32 %v439, 0.0
      %v524 = vmax.f32 %v442, 0.0
      %v525 = vmax.f32 %v447, 0.0
      %v526 = vmax.f32 %v450, 0.0
      %v527 = vmax.f32 %v455, 0.0
      %v528 = vmax.f32 %v458, 0.0
      %v529 = vmax.f32 %v463, 0.0
      %v530 = vmax.f32 %v466, 0.0
      %v531 = vmax.f32 %v471, 0.0
      %v532 = vmax.f32 %v474, 0.0
      %v533 = vmax.f32 %v479, 0.0
      %v534 = vmax.f32 %v482, 0.0
      %v535 = vmax.f32 %v487, 0.0
      %v536 = vmax.f32 %v490, 0.0
      %v537 = vmax.f32 %v495, 0.0
      %v538 = vmax.f32 %v498, 0.0
      %v539 = vmax.f32 %v503, 0.0
      %v540 = vmax.f32 %v506, 0.0
      %v541 = vpack.c.bf16 %v510, %v509
      %v542 = vpack.c.bf16 %v512, %v511
      %v543 = vpack.c.bf16 %v514, %v513
      %v544 = vpack.c.bf16 %v516, %v515
      %v545 = vpack.c.bf16 %v518, %v517
      %v546 = vpack.c.bf16 %v520, %v519
      %v547 = vpack.c.bf16 %v522, %v521
      %v548 = vpack.c.bf16 %v524, %v523
      %v549 = vpack.c.bf16 %v526, %v525
      %v550 = vpack.c.bf16 %v528, %v527
      %v551 = vpack.c.bf16 %v530, %v529
      %v552 = vpack.c.bf16 %v532, %v531
      %v553 = vpack.c.bf16 %v534, %v533
      %v554 = vpack.c.bf16 %v536, %v535
      %v555 = vpack.c.bf16 %v538, %v537
      %v556 = vpack.c.bf16 %v540, %v539
      %v573 = vunpack.c.l.b16 %v541
      %v574 = vunpack.c.h.b16 %v541
      %v575 = vunpack.c.l.b16 %v542
      %v576 = vunpack.c.h.b16 %v542
      %v577 = vunpack.c.l.b16 %v543
      %v578 = vunpack.c.h.b16 %v543
      %v579 = vunpack.c.l.b16 %v544
      %v580 = vunpack.c.h.b16 %v544
      %v581 = vunpack.c.l.b16 %v545
      %v582 = vunpack.c.h.b16 %v545
      %v583 = vunpack.c.l.b16 %v546
      %v584 = vunpack.c.h.b16 %v546
      %v585 = vunpack.c.l.b16 %v547
      %v586 = vunpack.c.h.b16 %v547
      %v587 = vunpack.c.l.b16 %v548
      %v588 = vunpack.c.h.b16 %v548
      %v589 = vunpack.c.l.b16 %v549
      %v590 = vunpack.c.h.b16 %v549
      %v591 = vunpack.c.l.b16 %v550
      %v592 = vunpack.c.h.b16 %v550
      %v593 = vunpack.c.l.b16 %v551
      %v594 = vunpack.c.h.b16 %v551
      %v595 = vunpack.c.l.b16 %v552
      %v596 = vunpack.c.h.b16 %v552
      %v597 = vunpack.c.l.b16 %v553
      %v598 = vunpack.c.h.b16 %v553
      %v599 = vunpack.c.l.b16 %v554
      %v600 = vunpack.c.h.b16 %v554
      %v601 = vunpack.c.l.b16 %v555
      %v602 = vunpack.c.h.b16 %v555
      %v603 = vunpack.c.l.b16 %v556
      %v604 = vunpack.c.h.b16 %v556
      %v605 = vpack.c.b16 %v573, %v573
      %v606 = vpack.c.b16 %v574, %v574
      %v607 = vpack.c.b16 %v575, %v575
      %v608 = vpack.c.b16 %v576, %v576
      %v609 = vpack.c.b16 %v577, %v577
      %v610 = vpack.c.b16 %v578, %v578
      %v611 = vpack.c.b16 %v579, %v579
      %v612 = vpack.c.b16 %v580, %v580
      %v613 = vpack.c.b16 %v581, %v581
      %v614 = vpack.c.b16 %v582, %v582
      %v615 = vpack.c.b16 %v583, %v583
      %v616 = vpack.c.b16 %v584, %v584
      %v617 = vpack.c.b16 %v585, %v585
      %v618 = vpack.c.b16 %v586, %v586
      %v619 = vpack.c.b16 %v587, %v587
      %v620 = vpack.c.b16 %v588, %v588
      %v621 = vpack.c.b16 %v589, %v589
      %v622 = vpack.c.b16 %v590, %v590
      %v623 = vpack.c.b16 %v591, %v591
      %v624 = vpack.c.b16 %v592, %v592
      %v625 = vpack.c.b16 %v593, %v593
      %v626 = vpack.c.b16 %v594, %v594
      %v627 = vpack.c.b16 %v595, %v595
      %v628 = vpack.c.b16 %v596, %v596
      %v629 = vpack.c.b16 %v597, %v597
      %v630 = vpack.c.b16 %v598, %v598
      %v631 = vpack.c.b16 %v599, %v599
      %v632 = vpack.c.b16 %v600, %v600
      %v633 = vpack.c.b16 %v601, %v601
      %v634 = vpack.c.b16 %v602, %v602
      %v635 = vpack.c.b16 %v603, %v603
      %v636 = vpack.c.b16 %v604, %v604
      %vm669 = vcmask 60416
      %670 = vst.msk [vmem:[%s172] sm:$0xf] %vm669, %v605
      %671 = vst.msk [vmem:[%s172 + $0x4] sm:$0xf] %vm669, %v606
      %672 = vst.msk [vmem:[%s172 + $0x8] sm:$0xf] %vm669, %v607
      %673 = vst.msk [vmem:[%s172 + $0xc] sm:$0xf] %vm669, %v608
      %674 = vst.msk [vmem:[%s172 + $0x10] sm:$0xf] %vm669, %v609
      %675 = vst.msk [vmem:[%s172 + $0x14] sm:$0xf] %vm669, %v610
      %676 = vst.msk [vmem:[%s172 + $0x18] sm:$0xf] %vm669, %v611
      %677 = vst.msk [vmem:[%s172 + $0x1c] sm:$0xf] %vm669, %v612
      %678 = vst.msk [vmem:[%s172 + $0x20] sm:$0xf] %vm669, %v613
      %679 = vst.msk [vmem:[%s172 + $0x24] sm:$0xf] %vm669, %v614
      %680 = vst.msk [vmem:[%s172 + $0x28] sm:$0xf] %vm669, %v615
      %681 = vst.msk [vmem:[%s172 + $0x2c] sm:$0xf] %vm669, %v616
      %682 = vst.msk [vmem:[%s172 + $0x30] sm:$0xf] %vm669, %v617
      %683 = vst.msk [vmem:[%s172 + $0x34] sm:$0xf] %vm669, %v618
      %684 = vst.msk [vmem:[%s172 + $0x38] sm:$0xf] %vm669, %v619
      %685 = vst.msk [vmem:[%s172 + $0x3c] sm:$0xf] %vm669, %v620
      %686 = vst.msk [vmem:[%s172 + $0x40] sm:$0xf] %vm669, %v621
      %687 = vst.msk [vmem:[%s172 + $0x44] sm:$0xf] %vm669, %v622
      %688 = vst.msk [vmem:[%s172 + $0x48] sm:$0xf] %vm669, %v623
      %689 = vst.msk [vmem:[%s172 + $0x4c] sm:$0xf] %vm669, %v624
      %690 = vst.msk [vmem:[%s172 + $0x50] sm:$0xf] %vm669, %v625
      %691 = vst.msk [vmem:[%s172 + $0x54] sm:$0xf] %vm669, %v626
      %692 = vst.msk [vmem:[%s172 + $0x58] sm:$0xf] %vm669, %v627
      %693 = vst.msk [vmem:[%s172 + $0x5c] sm:$0xf] %vm669, %v628
      %694 = vst.msk [vmem:[%s172 + $0x60] sm:$0xf] %vm669, %v629
      %695 = vst.msk [vmem:[%s172 + $0x64] sm:$0xf] %vm669, %v630
      %696 = vst.msk [vmem:[%s172 + $0x68] sm:$0xf] %vm669, %v631
      %697 = vst.msk [vmem:[%s172 + $0x6c] sm:$0xf] %vm669, %v632
      %698 = vst.msk [vmem:[%s172 + $0x70] sm:$0xf] %vm669, %v633
      %699 = vst.msk [vmem:[%s172 + $0x74] sm:$0xf] %vm669, %v634
      %700 = vst.msk [vmem:[%s172 + $0x78] sm:$0xf] %vm669, %v635
      %701 = vst.msk [vmem:[%s172 + $0x7c] sm:$0xf] %vm669, %v636
      %s702 = smul.u32 32, %s14
      %p703 = scmp.lt.s32.totalorder %s702, 63
      %s704 = scalar_select %p703, %s702, 63
      %s705 = smul.addr %s704, 4
      %s706 = scalar_lea.vmem %s3, %s705
      // Predicated region
      $region33: #{tcn_gcn_unit_forward.4} parent=31 // pred_check
        %p707 = pneg %p100
      $region34: #{tcn_gcn_unit_forward.4} parent=31 // pred_check_branch
        %709 = sbr.rel (%p707) target = $region36
      $region35: #{tcn_gcn_unit_forward.4} parent=31 // pred_region
        %s710 = smul.u32 32, %s14
      $region36: #{tcn_gcn_unit_forward.4} parent=31 // pred_fallthru
        _
    $region32: #{tcn_gcn_unit_forward.4} parent=5 // pred_fallthru
      _
    %p711 = scmp.le.s32.totalorder 2, %s9
    // Predicated region
    $region37: #{tcn_gcn_unit_forward.4} parent=5 // pred_check
      %p712 = pneg %p711
    $region38: #{tcn_gcn_unit_forward.4} parent=5 // pred_check_branch
      %714 = sbr.rel (%p712) target = $region40
    $region39: #{tcn_gcn_unit_forward.4} parent=5 // pred_region
      %s715 = ssub.s32 %s9, 2
      // Predicated region
      $region41: #{tcn_gcn_unit_forward.4} parent=39 // pred_check
        %p716 = pneg %p106
      $region42: #{tcn_gcn_unit_forward.4} parent=39 // pred_check_branch
        %718 = sbr.rel (%p716) target = $region44
      $region43: #{tcn_gcn_unit_forward.4} parent=39 // pred_region
        %s719 = smul.u32 32, %s15
        %p720 = scmp.lt.s32.totalorder %s719, 63
        %s721 = scalar_select %p720, %s719, 63
        %s722 = smul.addr %s721, 4
        %s723 = scalar_lea.vmem %s3, %s722
      $region44: #{tcn_gcn_unit_forward.4} parent=39 // pred_fallthru
        _
    $region40: #{tcn_gcn_unit_forward.4} parent=5 // pred_fallthru
      _
  $region6: #{tcn_gcn_unit_forward.4} parent=0 // loop_footer
    %s13 = sadd.s32 1, %s9
  $region7: #{tcn_gcn_unit_forward.4} parent=0 // loop_footer_branch
    %8 = sbr.rel target = $region3
  $region8: #{tcn_gcn_unit_forward.4} parent=0 // loop_exit
    _

// kernel: tcn_gcn_unit_forward.5
$region0: #{tcn_gcn_unit_forward.5}
  #allocation0 [shape = 'u32[]', space=smem, size = 0x4, offset = 0x4, fixed_abs, tag = 'smem constant byte address 0x4 - core index']
  #allocation1 [shape = 'u32[144,128]{1,0:T(1,128)}', space=vmem, size = 0x12000, scoped, tag = 'internal scratch']
  %s0 = inlined_call_operand.vmem [shape: bf16[512,8], index: 0, kind: input, shape index: {}]
  %s1 = inlined_call_operand.vmem [shape: bf16[512,8], index: 1, kind: input, shape index: {}]
  %s2 = inlined_call_operand.vmem [shape: f32[1,8], index: 2, kind: input, shape index: {}]
  %s3 = inlined_call_operand.vmem [shape: f32[1,8], index: 3, kind: input, shape index: {}]
  %s4 = inlined_call_operand.vmem [shape: f32[512,8], index: 4, kind: output, shape index: {}]
  %s5 = sld [smem:[#allocation0]]
  $region49: #{tcn_gcn_unit_forward.5} parent=0
    _
  %s7 = ssub.s32 1, %s5
  %s8 = scalar_select 0, %s7, %s5
  loop: start=0, step=1, limit=4
  $region2: #{tcn_gcn_unit_forward.5} parent=0 // loop_pre_header
    _
  $region3: #{tcn_gcn_unit_forward.5} parent=0 // loop_header
    %s10 = sphi 0, %s14
    %p11 = scmp.ge.s32.totalorder %s10, 4
    %s20 = sphi 0, %s22
    %s23 = sphi 0, %s20
    %s24 = sphi 0, %s23
    %s40 = sphi 0, %s24
    %s46 = sphi 0, %s48
    %s49 = sphi 0, %s46
    %s50 = sphi 0, %s49
    %s66 = sphi 0, %s50
    %s70 = sphi 0, %s70
    %s72 = sphi 0, %s70
    %s73 = sphi 0, %s72
    %s87 = sphi 0, %s73
    %s91 = sphi 0, %s91
    %s93 = sphi 0, %s91
    %s94 = sphi 0, %s93
    %s108 = sphi 0, %s94
    %s114 = sphi 0, %s116
    %s117 = sphi 0, %s114
    %s118 = sphi 0, %s117
    %s134 = sphi 0, %s118
  $region4: #{tcn_gcn_unit_forward.5} parent=0 // loop_header_branch
    %13 = sbr.rel (%p11) target = $region8
  $region5: #{tcn_gcn_unit_forward.5} parent=0 // loop_body
    %s15 = ssub.s32 %s10, 1
    %s16 = ssub.s32 %s10, 2
    %s17 = sadd.s32 %s10, 1
    %s18 = ssub.s32 %s10, %s17
    %p19 = scmp.eq.s32.totalorder %s18, 0
    %s21 = sadd.s32 %s20, 1
    %s22 = scalar_select %p19, %s20, %s21
    %p25 = pneg %p19
    %p26 = scmp.eq.s32.totalorder %s10, 1
    %p27 = por %p25, %p26
    %p28 = scmp.ne.s32.totalorder %s20, %s23
    %p29 = scmp.eq.s32.totalorder %s10, 0
    %p30 = por %p28, %p29
    %p31 = scmp.ne.s32.totalorder %s20, %s23
    %p32 = scmp.eq.s32.totalorder %s15, 1
    %p33 = por %p31, %p32
    %p34 = scmp.ne.s32.totalorder %s23, %s24
    %p35 = scmp.eq.s32.totalorder %s15, 0
    %p36 = por %p34, %p35
    %p37 = scmp.ne.s32.totalorder %s23, %s24
    %p38 = scmp.eq.s32.totalorder %s16, 1
    %p39 = por %p37, %p38
    %p41 = scmp.ne.s32.totalorder %s24, %s40
    %p42 = scmp.eq.s32.totalorder %s16, 0
    %p43 = por %p41, %p42
    %s44 = ssub.s32 %s10, %s17
    %p45 = scmp.eq.s32.totalorder %s44, 0
    %s47 = sadd.s32 %s46, 1
    %s48 = scalar_select %p45, %s46, %s47
    %p51 = pneg %p45
    %p52 = scmp.eq.s32.totalorder %s10, 1
    %p53 = por %p51, %p52
    %p54 = scmp.ne.s32.totalorder %s46, %s49
    %p55 = scmp.eq.s32.totalorder %s10, 0
    %p56 = por %p54, %p55
    %p57 = scmp.ne.s32.totalorder %s46, %s49
    %p58 = scmp.eq.s32.totalorder %s15, 1
    %p59 = por %p57, %p58
    %p60 = scmp.ne.s32.totalorder %s49, %s50
    %p61 = scmp.eq.s32.totalorder %s15, 0
    %p62 = por %p60, %p61
    %p63 = scmp.ne.s32.totalorder %s49, %s50
    %p64 = scmp.eq.s32.totalorder %s16, 1
    %p65 = por %p63, %p64
    %p67 = scmp.ne.s32.totalorder %s50, %s66
    %p68 = scmp.eq.s32.totalorder %s16, 0
    %p69 = por %p67, %p68
    %s71 = sadd.s32 %s70, 1
    %p74 = scmp.eq.s32.totalorder %s10, 1
    %p75 = scmp.ne.s32.totalorder %s70, %s72
    %p76 = scmp.eq.s32.totalorder %s10, 0
    %p77 = por %p75, %p76
    %p78 = scmp.ne.s32.totalorder %s70, %s72
    %p79 = scmp.eq.s32.totalorder %s15, 1
    %p80 = por %p78, %p79
    %p81 = scmp.ne.s32.totalorder %s72, %s73
    %p82 = scmp.eq.s32.totalorder %s15, 0
    %p83 = por %p81, %p82
    %p84 = scmp.ne.s32.totalorder %s72, %s73
    %p85 = scmp.eq.s32.totalorder %s16, 1
    %p86 = por %p84, %p85
    %p88 = scmp.ne.s32.totalorder %s73, %s87
    %p89 = scmp.eq.s32.totalorder %s16, 0
    %p90 = por %p88, %p89
    %s92 = sadd.s32 %s91, 1
    %p95 = scmp.eq.s32.totalorder %s10, 1
    %p96 = scmp.ne.s32.totalorder %s91, %s93
    %p97 = scmp.eq.s32.totalorder %s10, 0
    %p98 = por %p96, %p97
    %p99 = scmp.ne.s32.totalorder %s91, %s93
    %p100 = scmp.eq.s32.totalorder %s15, 1
    %p101 = por %p99, %p100
    %p102 = scmp.ne.s32.totalorder %s93, %s94
    %p103 = scmp.eq.s32.totalorder %s15, 0
    %p104 = por %p102, %p103
    %p105 = scmp.ne.s32.totalorder %s93, %s94
    %p106 = scmp.eq.s32.totalorder %s16, 1
    %p107 = por %p105, %p106
    %p109 = scmp.ne.s32.totalorder %s94, %s108
    %p110 = scmp.eq.s32.totalorder %s16, 0
    %p111 = por %p109, %p110
    %s112 = ssub.s32 %s10, %s17
    %p113 = scmp.eq.s32.totalorder %s112, 0
    %s115 = sadd.s32 %s114, 1
    %s116 = scalar_select %p113, %s114, %s115
    %p119 = pneg %p113
    %p120 = scmp.eq.s32.totalorder %s10, 1
    %p121 = por %p119, %p120
    %p122 = scmp.ne.s32.totalorder %s114, %s117
    %p123 = scmp.eq.s32.totalorder %s10, 0
    %p124 = por %p122, %p123
    %p125 = scmp.ne.s32.totalorder %s114, %s117
    %p126 = scmp.eq.s32.totalorder %s15, 1
    %p127 = por %p125, %p126
    %p128 = scmp.ne.s32.totalorder %s117, %s118
    %p129 = scmp.eq.s32.totalorder %s15, 0
    %p130 = por %p128, %p129
    %p131 = scmp.ne.s32.totalorder %s117, %s118
    %p132 = scmp.eq.s32.totalorder %s16, 1
    %p133 = por %p131, %p132
    %p135 = scmp.ne.s32.totalorder %s118, %s134
    %p136 = scmp.eq.s32.totalorder %s16, 0
    %p137 = por %p135, %p136
    %p138 = scmp.le.s32.totalorder 1, %s10
    %p139 = scmp.lt.s32.totalorder %s10, 3
    %p140 = pnand %p138, %p139
    %p141 = pneg %p140
    // Predicated region
    $region9: #{tcn_gcn_unit_forward.5} parent=5 // pred_check
      _
    $region10: #{tcn_gcn_unit_forward.5} parent=5 // pred_check_branch
      %143 = sbr.rel (%p140) target = $region12
    $region11: #{tcn_gcn_unit_forward.5} parent=5 // pred_region
      %s144 = ssub.s32 %s10, 1
      // Predicated region
      $region13: #{tcn_gcn_unit_forward.5} parent=11 // pred_check
        %p145 = pneg %p83
      $region14: #{tcn_gcn_unit_forward.5} parent=11 // pred_check_branch
        %147 = sbr.rel (%p145) target = $region16
      $region15: #{tcn_gcn_unit_forward.5} parent=11 // pred_region
        _
      $region16: #{tcn_gcn_unit_forward.5} parent=11 // pred_fallthru
        _
      // Predicated region
      $region17: #{tcn_gcn_unit_forward.5} parent=11 // pred_check
        %p148 = pneg %p104
      $region18: #{tcn_gcn_unit_forward.5} parent=11 // pred_check_branch
        %150 = sbr.rel (%p148) target = $region20
      $region19: #{tcn_gcn_unit_forward.5} parent=11 // pred_region
        _
      $region20: #{tcn_gcn_unit_forward.5} parent=11 // pred_fallthru
        _
    $region12: #{tcn_gcn_unit_forward.5} parent=5 // pred_fallthru
      _
    %p151 = scmp.lt.s32.totalorder %s10, 2
    // Predicated region
    $region21: #{tcn_gcn_unit_forward.5} parent=5 // pred_check
      %p152 = pneg %p151
    $region22: #{tcn_gcn_unit_forward.5} parent=5 // pred_check_branch
      %154 = sbr.rel (%p152) target = $region24
    $region23: #{tcn_gcn_unit_forward.5} parent=5 // pred_region
      // Predicated region
      $region25: #{tcn_gcn_unit_forward.5} parent=23 // pred_check
        %p155 = pneg %p30
      $region26: #{tcn_gcn_unit_forward.5} parent=23 // pred_check_branch
        %157 = sbr.rel (%p155) target = $region28
      $region27: #{tcn_gcn_unit_forward.5} parent=23 // pred_region
        %s158 = smul.u32 32, %s10
        %p159 = scmp.lt.s32.totalorder %s158, 63
        %s160 = scalar_select %p159, %s158, 63
        %s161 = smul.addr %s160, 4
        %s162 = scalar_lea.vmem %s0, %s161
        %s163 = smul.u32 32, %s10
      $region28: #{tcn_gcn_unit_forward.5} parent=23 // pred_fallthru
        _
      // Predicated region
      $region29: #{tcn_gcn_unit_forward.5} parent=23 // pred_check
        %p164 = pneg %p56
      $region30: #{tcn_gcn_unit_forward.5} parent=23 // pred_check_branch
        %166 = sbr.rel (%p164) target = $region32
      $region31: #{tcn_gcn_unit_forward.5} parent=23 // pred_region
        %s167 = smul.u32 32, %s10
        %p168 = scmp.lt.s32.totalorder %s167, 63
        %s169 = scalar_select %p168, %s167, 63
        %s170 = smul.addr %s169, 4
        %s171 = scalar_lea.vmem %s1, %s170
        %s172 = smul.u32 32, %s10
      $region32: #{tcn_gcn_unit_forward.5} parent=23 // pred_fallthru
        _
    $region24: #{tcn_gcn_unit_forward.5} parent=5 // pred_fallthru
      _
    %p173 = scmp.le.s32.totalorder 1, %s10
    %p174 = scmp.lt.s32.totalorder %s10, 3
    %p175 = pnand %p173, %p174
    %p176 = pneg %p175
    // Predicated region
    $region33: #{tcn_gcn_unit_forward.5} parent=5 // pred_check
      _
    $region34: #{tcn_gcn_unit_forward.5} parent=5 // pred_check_branch
      %178 = sbr.rel (%p175) target = $region36
    $region35: #{tcn_gcn_unit_forward.5} parent=5 // pred_region
      %s179 = ssub.s32 %s10, 1
      %s180 = smul.u32 32, %s15
      %p181 = scmp.lt.s32.totalorder %s180, 63
      %s182 = scalar_select %p181, %s180, 63
      %s183 = smul.addr %s182, 4
      %s184 = scalar_lea.vmem %s0, %s183
      %p185 = pneg %p36
      %p186 = pneg %p33
      %s187 = smul.u32 32, %s15
      %p188 = scmp.lt.s32.totalorder %s187, 63
      %s189 = scalar_select %p188, %s187, 63
      %s190 = smul.addr %s189, 4
      %s191 = scalar_lea.vmem %s1, %s190
      %p192 = pneg %p62
      %p193 = pneg %p59
      %p194 = pneg %p83
      %p195 = pneg %p80
      %p196 = pneg %p104
      %p197 = pneg %p101
      %p198 = pneg %p130
      %p199 = pneg %p127
      %s200 = smul.u32 32, %s15
      %p201 = scmp.lt.s32.totalorder %s200, 63
      %s202 = scalar_select %p201, %s200, 63
      %s203 = smul.addr %s202, 8
      %s204 = scalar_lea.vmem %s4, %s203
      %s205 = smul.u32 32, %s15
      %p206 = scmp.lt.s32.totalorder %s205, 63
      %s207 = scalar_select %p206, %s205, 63
      %s208 = smul.addr %s207, 4
      %s209 = scalar_lea.vmem %s0, %s208
      %s210 = smul.u32 32, %s15
      %s211 = smul.u32 32, %s15
      %p212 = scmp.lt.s32.totalorder %s211, 63
      %s213 = scalar_select %p212, %s211, 63
      %s214 = smul.addr %s213, 4
      %s215 = scalar_lea.vmem %s1, %s214
      %s216 = smul.u32 32, %s15
      %s217 = smul.u32 32, %s15
      %p218 = scmp.lt.s32.totalorder %s217, 63
      %s219 = scalar_select %p218, %s217, 63
      %s220 = smul.addr %s219, 8
      %s221 = scalar_lea.vmem %s4, %s220
      %s222 = smul.u32 32, %s15
      %v223 = vld [vmem:[%s209] sm:$0xf]
      %v224 = vld [vmem:[%s209 + $0x4] sm:$0xf]
      %v225 = vld [vmem:[%s209 + $0x8] sm:$0xf]
      %v226 = vld [vmem:[%s209 + $0xc] sm:$0xf]
      %v227 = vld [vmem:[%s209 + $0x10] sm:$0xf]
      %v228 = vld [vmem:[%s209 + $0x14] sm:$0xf]
      %v229 = vld [vmem:[%s209 + $0x18] sm:$0xf]
      %v230 = vld [vmem:[%s209 + $0x1c] sm:$0xf]
      %v231 = vld [vmem:[%s209 + $0x20] sm:$0xf]
      %v232 = vld [vmem:[%s209 + $0x24] sm:$0xf]
      %v233 = vld [vmem:[%s209 + $0x28] sm:$0xf]
      %v234 = vld [vmem:[%s209 + $0x2c] sm:$0xf]
      %v235 = vld [vmem:[%s209 + $0x30] sm:$0xf]
      %v236 = vld [vmem:[%s209 + $0x34] sm:$0xf]
      %v237 = vld [vmem:[%s209 + $0x38] sm:$0xf]
      %v238 = vld [vmem:[%s209 + $0x3c] sm:$0xf]
      %v239 = vld [vmem:[%s209 + $0x40] sm:$0xf]
      %v240 = vld [vmem:[%s209 + $0x44] sm:$0xf]
      %v241 = vld [vmem:[%s209 + $0x48] sm:$0xf]
      %v242 = vld [vmem:[%s209 + $0x4c] sm:$0xf]
      %v243 = vld [vmem:[%s209 + $0x50] sm:$0xf]
      %v244 = vld [vmem:[%s209 + $0x54] sm:$0xf]
      %v245 = vld [vmem:[%s209 + $0x58] sm:$0xf]
      %v246 = vld [vmem:[%s209 + $0x5c] sm:$0xf]
      %v247 = vld [vmem:[%s209 + $0x60] sm:$0xf]
      %v248 = vld [vmem:[%s209 + $0x64] sm:$0xf]
      %v249 = vld [vmem:[%s209 + $0x68] sm:$0xf]
      %v250 = vld [vmem:[%s209 + $0x6c] sm:$0xf]
      %v251 = vld [vmem:[%s209 + $0x70] sm:$0xf]
      %v252 = vld [vmem:[%s209 + $0x74] sm:$0xf]
      %v253 = vld [vmem:[%s209 + $0x78] sm:$0xf]
      %v254 = vld [vmem:[%s209 + $0x7c] sm:$0xf]
      %v255 = vld [vmem:[%s2] sm:$0x1]
      %v256 = vunpack.c.l.bf16 %v223
      %v257 = vunpack.c.l.bf16 %v224
      %v258 = vunpack.c.l.bf16 %v225
      %v259 = vunpack.c.l.bf16 %v226
      %v260 = vunpack.c.l.bf16 %v227
      %v261 = vunpack.c.l.bf16 %v228
      %v262 = vunpack.c.l.bf16 %v229
      %v263 = vunpack.c.l.bf16 %v230
      %v264 = vunpack.c.l.bf16 %v231
      %v265 = vunpack.c.l.bf16 %v232
      %v266 = vunpack.c.l.bf16 %v233
      %v267 = vunpack.c.l.bf16 %v234
      %v268 = vunpack.c.l.bf16 %v235
      %v269 = vunpack.c.l.bf16 %v236
      %v270 = vunpack.c.l.bf16 %v237
      %v271 = vunpack.c.l.bf16 %v238
      %v272 = vunpack.c.l.bf16 %v239
      %v273 = vunpack.c.l.bf16 %v240
      %v274 = vunpack.c.l.bf16 %v241
      %v275 = vunpack.c.l.bf16 %v242
      %v276 = vunpack.c.l.bf16 %v243
      %v277 = vunpack.c.l.bf16 %v244
      %v278 = vunpack.c.l.bf16 %v245
      %v279 = vunpack.c.l.bf16 %v246
      %v280 = vunpack.c.l.bf16 %v247
      %v281 = vunpack.c.l.bf16 %v248
      %v282 = vunpack.c.l.bf16 %v249
      %v283 = vunpack.c.l.bf16 %v250
      %v284 = vunpack.c.l.bf16 %v251
      %v285 = vunpack.c.l.bf16 %v252
      %v286 = vunpack.c.l.bf16 %v253
      %v287 = vunpack.c.l.bf16 %v254
      %v289 = vlaneseq
      %v290 = vshrl.u32 %v289, 7
      %v291 = vsub.s32 0, %v290
      %v292 = vrot.slane %v255, %v291
      %v294 = vmul.f32 %v256, %v292
      %v295 = vmul.f32 %v257, %v292
      %v296 = vmul.f32 %v258, %v292
      %v297 = vmul.f32 %v259, %v292
      %v298 = vmul.f32 %v260, %v292
      %v299 = vmul.f32 %v261, %v292
      %v300 = vmul.f32 %v262, %v292
      %v301 = vmul.f32 %v263, %v292
      %v302 = vmul.f32 %v264, %v292
      %v303 = vmul.f32 %v265, %v292
      %v304 = vmul.f32 %v266, %v292
      %v305 = vmul.f32 %v267, %v292
      %v306 = vmul.f32 %v268, %v292
      %v307 = vmul.f32 %v269, %v292
      %v308 = vmul.f32 %v270, %v292
      %v309 = vmul.f32 %v271, %v292
      %v310 = vmul.f32 %v272, %v292
      %v311 = vmul.f32 %v273, %v292
      %v312 = vmul.f32 %v274, %v292
      %v313 = vmul.f32 %v275, %v292
      %v314 = vmul.f32 %v276, %v292
      %v315 = vmul.f32 %v277, %v292
      %v316 = vmul.f32 %v278, %v292
      %v317 = vmul.f32 %v279, %v292
      %v318 = vmul.f32 %v280, %v292
      %v319 = vmul.f32 %v281, %v292
      %v320 = vmul.f32 %v282, %v292
      %v321 = vmul.f32 %v283, %v292
      %v322 = vmul.f32 %v284, %v292
      %v323 = vmul.f32 %v285, %v292
      %v324 = vmul.f32 %v286, %v292
      %v325 = vmul.f32 %v287, %v292
      %v326 = vld [vmem:[%s3] sm:$0x1]
      %v328 = vlaneseq
      %v329 = vshrl.u32 %v328, 7
      %v330 = vsub.s32 0, %v329
      %v331 = vrot.slane %v326, %v330
      %v333 = vadd.f32 %v294, %v331
      %v334 = vadd.f32 %v295, %v331
      %v335 = vadd.f32 %v296, %v331
      %v336 = vadd.f32 %v297, %v331
      %v337 = vadd.f32 %v298, %v331
      %v338 = vadd.f32 %v299, %v331
      %v339 = vadd.f32 %v300, %v331
      %v340 = vadd.f32 %v301, %v331
      %v341 = vadd.f32 %v302, %v331
      %v342 = vadd.f32 %v303, %v331
      %v343 = vadd.f32 %v304, %v331
      %v344 = vadd.f32 %v305, %v331
      %v345 = vadd.f32 %v306, %v331
      %v346 = vadd.f32 %v307, %v331
      %v347 = vadd.f32 %v308, %v331
      %v348 = vadd.f32 %v309, %v331
      %v349 = vadd.f32 %v310, %v331
      %v350 = vadd.f32 %v311, %v331
      %v351 = vadd.f32 %v312, %v331
      %v352 = vadd.f32 %v313, %v331
      %v353 = vadd.f32 %v314, %v331
      %v354 = vadd.f32 %v315, %v331
      %v355 = vadd.f32 %v316, %v331
      %v356 = vadd.f32 %v317, %v331
      %v357 = vadd.f32 %v318, %v331
      %v358 = vadd.f32 %v319, %v331
      %v359 = vadd.f32 %v320, %v331
      %v360 = vadd.f32 %v321, %v331
      %v361 = vadd.f32 %v322, %v331
      %v362 = vadd.f32 %v323, %v331
      %v363 = vadd.f32 %v324, %v331
      %v364 = vadd.f32 %v325, %v331
      %v365 = vld [vmem:[%s215] sm:$0xf]
      %v366 = vld [vmem:[%s215 + $0x4] sm:$0xf]
      %v367 = vld [vmem:[%s215 + $0x8] sm:$0xf]
      %v368 = vld [vmem:[%s215 + $0xc] sm:$0xf]
      %v369 = vld [vmem:[%s215 + $0x10] sm:$0xf]
      %v370 = vld [vmem:[%s215 + $0x14] sm:$0xf]
      %v371 = vld [vmem:[%s215 + $0x18] sm:$0xf]
      %v372 = vld [vmem:[%s215 + $0x1c] sm:$0xf]
      %v373 = vld [vmem:[%s215 + $0x20] sm:$0xf]
      %v374 = vld [vmem:[%s215 + $0x24] sm:$0xf]
      %v375 = vld [vmem:[%s215 + $0x28] sm:$0xf]
      %v376 = vld [vmem:[%s215 + $0x2c] sm:$0xf]
      %v377 = vld [vmem:[%s215 + $0x30] sm:$0xf]
      %v378 = vld [vmem:[%s215 + $0x34] sm:$0xf]
      %v379 = vld [vmem:[%s215 + $0x38] sm:$0xf]
      %v380 = vld [vmem:[%s215 + $0x3c] sm:$0xf]
      %v381 = vld [vmem:[%s215 + $0x40] sm:$0xf]
      %v382 = vld [vmem:[%s215 + $0x44] sm:$0xf]
      %v383 = vld [vmem:[%s215 + $0x48] sm:$0xf]
      %v384 = vld [vmem:[%s215 + $0x4c] sm:$0xf]
      %v385 = vld [vmem:[%s215 + $0x50] sm:$0xf]
      %v386 = vld [vmem:[%s215 + $0x54] sm:$0xf]
      %v387 = vld [vmem:[%s215 + $0x58] sm:$0xf]
      %v388 = vld [vmem:[%s215 + $0x5c] sm:$0xf]
      %v389 = vld [vmem:[%s215 + $0x60] sm:$0xf]
      %v390 = vld [vmem:[%s215 + $0x64] sm:$0xf]
      %v391 = vld [vmem:[%s215 + $0x68] sm:$0xf]
      %v392 = vld [vmem:[%s215 + $0x6c] sm:$0xf]
      %v393 = vld [vmem:[%s215 + $0x70] sm:$0xf]
      %v394 = vld [vmem:[%s215 + $0x74] sm:$0xf]
      %v395 = vld [vmem:[%s215 + $0x78] sm:$0xf]
      %v396 = vld [vmem:[%s215 + $0x7c] sm:$0xf]
      %v397 = vunpack.c.l.bf16 %v365
      %v398 = vunpack.c.l.bf16 %v366
      %v399 = vunpack.c.l.bf16 %v367
      %v400 = vunpack.c.l.bf16 %v368
      %v401 = vunpack.c.l.bf16 %v369
      %v402 = vunpack.c.l.bf16 %v370
      %v403 = vunpack.c.l.bf16 %v371
      %v404 = vunpack.c.l.bf16 %v372
      %v405 = vunpack.c.l.bf16 %v373
      %v406 = vunpack.c.l.bf16 %v374
      %v407 = vunpack.c.l.bf16 %v375
      %v408 = vunpack.c.l.bf16 %v376
      %v409 = vunpack.c.l.bf16 %v377
      %v410 = vunpack.c.l.bf16 %v378
      %v411 = vunpack.c.l.bf16 %v379
      %v412 = vunpack.c.l.bf16 %v380
      %v413 = vunpack.c.l.bf16 %v381
      %v414 = vunpack.c.l.bf16 %v382
      %v415 = vunpack.c.l.bf16 %v383
      %v416 = vunpack.c.l.bf16 %v384
      %v417 = vunpack.c.l.bf16 %v385
      %v418 = vunpack.c.l.bf16 %v386
      %v419 = vunpack.c.l.bf16 %v387
      %v420 = vunpack.c.l.bf16 %v388
      %v421 = vunpack.c.l.bf16 %v389
      %v422 = vunpack.c.l.bf16 %v390
      %v423 = vunpack.c.l.bf16 %v391
      %v424 = vunpack.c.l.bf16 %v392
      %v425 = vunpack.c.l.bf16 %v393
      %v426 = vunpack.c.l.bf16 %v394
      %v427 = vunpack.c.l.bf16 %v395
      %v428 = vunpack.c.l.bf16 %v396
      %v429 = vadd.f32 %v333, %v397
      %v430 = vadd.f32 %v334, %v398
      %v431 = vadd.f32 %v335, %v399
      %v432 = vadd.f32 %v336, %v400
      %v433 = vadd.f32 %v337, %v401
      %v434 = vadd.f32 %v338, %v402
      %v435 = vadd.f32 %v339, %v403
      %v436 = vadd.f32 %v340, %v404
      %v437 = vadd.f32 %v341, %v405
      %v438 = vadd.f32 %v342, %v406
      %v439 = vadd.f32 %v343, %v407
      %v440 = vadd.f32 %v344, %v408
      %v441 = vadd.f32 %v345, %v409
      %v442 = vadd.f32 %v346, %v410
      %v443 = vadd.f32 %v347, %v411
      %v444 = vadd.f32 %v348, %v412
      %v445 = vadd.f32 %v349, %v413
      %v446 = vadd.f32 %v350, %v414
      %v447 = vadd.f32 %v351, %v415
      %v448 = vadd.f32 %v352, %v416
      %v449 = vadd.f32 %v353, %v417
      %v450 = vadd.f32 %v354, %v418
      %v451 = vadd.f32 %v355, %v419
      %v452 = vadd.f32 %v356, %v420
      %v453 = vadd.f32 %v357, %v421
      %v454 = vadd.f32 %v358, %v422
      %v455 = vadd.f32 %v359, %v423
      %v456 = vadd.f32 %v360, %v424
      %v457 = vadd.f32 %v361, %v425
      %v458 = vadd.f32 %v362, %v426
      %v459 = vadd.f32 %v363, %v427
      %v460 = vadd.f32 %v364, %v428
      %v461 = vmax.f32 %v429, 0.0
      %v462 = vmax.f32 %v430, 0.0
      %v463 = vmax.f32 %v431, 0.0
      %v464 = vmax.f32 %v432, 0.0
      %v465 = vmax.f32 %v433, 0.0
      %v466 = vmax.f32 %v434, 0.0
      %v467 = vmax.f32 %v435, 0.0
      %v468 = vmax.f32 %v436, 0.0
      %v469 = vmax.f32 %v437, 0.0
      %v470 = vmax.f32 %v438, 0.0
      %v471 = vmax.f32 %v439, 0.0
      %v472 = vmax.f32 %v440, 0.0
      %v473 = vmax.f32 %v441, 0.0
      %v474 = vmax.f32 %v442, 0.0
      %v475 = vmax.f32 %v443, 0.0
      %v476 = vmax.f32 %v444, 0.0
      %v477 = vmax.f32 %v445, 0.0
      %v478 = vmax.f32 %v446, 0.0
      %v479 = vmax.f32 %v447, 0.0
      %v480 = vmax.f32 %v448, 0.0
      %v481 = vmax.f32 %v449, 0.0
      %v482 = vmax.f32 %v450, 0.0
      %v483 = vmax.f32 %v451, 0.0
      %v484 = vmax.f32 %v452, 0.0
      %v485 = vmax.f32 %v453, 0.0
      %v486 = vmax.f32 %v454, 0.0
      %v487 = vmax.f32 %v455, 0.0
      %v488 = vmax.f32 %v456, 0.0
      %v489 = vmax.f32 %v457, 0.0
      %v490 = vmax.f32 %v458, 0.0
      %v491 = vmax.f32 %v459, 0.0
      %v492 = vmax.f32 %v460, 0.0
      %vm493 = vcmask 64512
      %494 = vst.msk [vmem:[%s221] sm:$0xff] %vm493, %v461
      %495 = vst.msk [vmem:[%s221 + $0x8] sm:$0xff] %vm493, %v462
      %496 = vst.msk [vmem:[%s221 + $0x10] sm:$0xff] %vm493, %v463
      %497 = vst.msk [vmem:[%s221 + $0x18] sm:$0xff] %vm493, %v464
      %498 = vst.msk [vmem:[%s221 + $0x20] sm:$0xff] %vm493, %v465
      %499 = vst.msk [vmem:[%s221 + $0x28] sm:$0xff] %vm493, %v466
      %500 = vst.msk [vmem:[%s221 + $0x30] sm:$0xff] %vm493, %v467
      %501 = vst.msk [vmem:[%s221 + $0x38] sm:$0xff] %vm493, %v468
      %502 = vst.msk [vmem:[%s221 + $0x40] sm:$0xff] %vm493, %v469
      %503 = vst.msk [vmem:[%s221 + $0x48] sm:$0xff] %vm493, %v470
      %504 = vst.msk [vmem:[%s221 + $0x50] sm:$0xff] %vm493, %v471
      %505 = vst.msk [vmem:[%s221 + $0x58] sm:$0xff] %vm493, %v472
      %506 = vst.msk [vmem:[%s221 + $0x60] sm:$0xff] %vm493, %v473
      %507 = vst.msk [vmem:[%s221 + $0x68] sm:$0xff] %vm493, %v474
      %508 = vst.msk [vmem:[%s221 + $0x70] sm:$0xff] %vm493, %v475
      %509 = vst.msk [vmem:[%s221 + $0x78] sm:$0xff] %vm493, %v476
      %510 = vst.msk [vmem:[%s221 + $0x80] sm:$0xff] %vm493, %v477
      %511 = vst.msk [vmem:[%s221 + $0x88] sm:$0xff] %vm493, %v478
      %512 = vst.msk [vmem:[%s221 + $0x90] sm:$0xff] %vm493, %v479
      %513 = vst.msk [vmem:[%s221 + $0x98] sm:$0xff] %vm493, %v480
      %514 = vst.msk [vmem:[%s221 + $0xa0] sm:$0xff] %vm493, %v481
      %515 = vst.msk [vmem:[%s221 + $0xa8] sm:$0xff] %vm493, %v482
      %516 = vst.msk [vmem:[%s221 + $0xb0] sm:$0xff] %vm493, %v483
      %517 = vst.msk [vmem:[%s221 + $0xb8] sm:$0xff] %vm493, %v484
      %518 = vst.msk [vmem:[%s221 + $0xc0] sm:$0xff] %vm493, %v485
      %519 = vst.msk [vmem:[%s221 + $0xc8] sm:$0xff] %vm493, %v486
      %520 = vst.msk [vmem:[%s221 + $0xd0] sm:$0xff] %vm493, %v487
      %521 = vst.msk [vmem:[%s221 + $0xd8] sm:$0xff] %vm493, %v488
      %522 = vst.msk [vmem:[%s221 + $0xe0] sm:$0xff] %vm493, %v489
      %523 = vst.msk [vmem:[%s221 + $0xe8] sm:$0xff] %vm493, %v490
      %524 = vst.msk [vmem:[%s221 + $0xf0] sm:$0xff] %vm493, %v491
      %525 = vst.msk [vmem:[%s221 + $0xf8] sm:$0xff] %vm493, %v492
      %s526 = smul.u32 32, %s15
      %p527 = scmp.lt.s32.totalorder %s526, 63
      %s528 = scalar_select %p527, %s526, 63
      %s529 = smul.addr %s528, 8
      %s530 = scalar_lea.vmem %s4, %s529
      // Predicated region
      $region37: #{tcn_gcn_unit_forward.5} parent=35 // pred_check
        %p531 = pneg %p127
      $region38: #{tcn_gcn_unit_forward.5} parent=35 // pred_check_branch
        %533 = sbr.rel (%p531) target = $region40
      $region39: #{tcn_gcn_unit_forward.5} parent=35 // pred_region
        %s534 = smul.u32 32, %s15
      $region40: #{tcn_gcn_unit_forward.5} parent=35 // pred_fallthru
        _
    $region36: #{tcn_gcn_unit_forward.5} parent=5 // pred_fallthru
      _
    %p535 = scmp.le.s32.totalorder 2, %s10
    // Predicated region
    $region41: #{tcn_gcn_unit_forward.5} parent=5 // pred_check
      %p536 = pneg %p535
    $region42: #{tcn_gcn_unit_forward.5} parent=5 // pred_check_branch
      %538 = sbr.rel (%p536) target = $region44
    $region43: #{tcn_gcn_unit_forward.5} parent=5 // pred_region
      %s539 = ssub.s32 %s10, 2
      // Predicated region
      $region45: #{tcn_gcn_unit_forward.5} parent=43 // pred_check
        %p540 = pneg %p133
      $region46: #{tcn_gcn_unit_forward.5} parent=43 // pred_check_branch
        %542 = sbr.rel (%p540) target = $region48
      $region47: #{tcn_gcn_unit_forward.5} parent=43 // pred_region
        %s543 = smul.u32 32, %s16
        %p544 = scmp.lt.s32.totalorder %s543, 63
        %s545 = scalar_select %p544, %s543, 63
        %s546 = smul.addr %s545, 8
        %s547 = scalar_lea.vmem %s4, %s546
      $region48: #{tcn_gcn_unit_forward.5} parent=43 // pred_fallthru
        _
    $region44: #{tcn_gcn_unit_forward.5} parent=5 // pred_fallthru
      _
  $region6: #{tcn_gcn_unit_forward.5} parent=0 // loop_footer
    %s14 = sadd.s32 1, %s10
  $region7: #{tcn_gcn_unit_forward.5} parent=0 // loop_footer_branch
    %9 = sbr.rel target = $region3
  $region8: #{tcn_gcn_unit_forward.5} parent=0 // loop_exit
    _

</llo_original>
